<compile_context>
chip_gen: v7x
topology: tpu7x:2x2x1
jax: 0.10.0
libtpu: 0.0.40
codegen_flags: <defaults>
</compile_context>

<pallas_src>
import functools
import math

import jax
import jax.numpy as jnp
from jax.experimental import pallas as pl
from jax.experimental.pallas import tpu as pltpu

LN_EPS = 1e-12  # BERT LayerNorm eps


# ----------------------------- in-kernel helpers -----------------------------

def _bf16(x):
    return x.astype(jnp.bfloat16)


def _layernorm(x, g, b):
    mu = jnp.mean(x, axis=-1, keepdims=True)
    var = jnp.mean(jnp.square(x - mu), axis=-1, keepdims=True)
    return (x - mu) * jax.lax.rsqrt(var + LN_EPS) * g + b


def _gelu(x):
    # exact erf-based GELU (matches HF BERT); one EUP transcendental/elt.
    return 0.5 * x * (1.0 + jax.lax.erf(x * 0.7071067811865475))


# ----------------------------- fused Pallas kernel ---------------------------

def bert_kernel(
        emb_ref, mask_ref,
        emb_ln_g_ref, emb_ln_b_ref,
        wqkv_ref, bqkv_ref, wo_ref, bo_ref, ln1_g_ref, ln1_b_ref,
        w1_ref, b1_ref, w2_ref, b2_ref, ln2_g_ref, ln2_b_ref,
        cls_w_ref, cls_b_ref, fc1_w_ref, fc1_b_ref, fc2_w_ref, fc2_b_ref,
        out_ref,
        x_ref,                                 # VMEM scratch [B*S, H] f32
        *, batch, seq, num_heads):
    """One grid step == one transformer layer, whole batch at once."""
    B, S, nH = batch, seq, num_heads
    T = B * S
    H = x_ref.shape[-1]
    dH = H // nH
    layer = pl.program_id(0)

    # ---- step 0: embedding LayerNorm into the carried hidden state ----
    @pl.when(layer == 0)
    def _():
        emb = emb_ref[...].astype(jnp.float32).reshape(T, H)   # bf16 -> f32
        x_ref[...] = _layernorm(emb, emb_ln_g_ref[...], emb_ln_b_ref[...])

    x = x_ref[...]                                              # [T, H] f32

    # ---- self-attention (whole batch, all heads) ----
    # fused QKV projection: one [T, H] @ [H, 3H] MXU matmul
    # (the 1/sqrt(dH) score scale is folded into the Q weights at init)
    qkv = jnp.dot(_bf16(x), wqkv_ref[0],
                  preferred_element_type=jnp.float32) + bqkv_ref[0]   # [T, 3H]

    # stack heads onto the leading (batch) axis so that scores / context are
    # each a single batched 3-D dot_general over (head, batch) instead of
    # num_heads tiny per-head 2-D matmuls.
    def to_heads(col0):
        parts = [qkv[:, col0 + h * dH: col0 + (h + 1) * dH].reshape(B, S, dH)
                 for h in range(nH)]
        return _bf16(jnp.concatenate(parts, axis=0))            # [nH*B, S, dH]

    q = to_heads(0)
    k = to_heads(H)
    v = to_heads(2 * H)

    scores = jnp.einsum("bqd,bkd->bqk", q, k,
                        preferred_element_type=jnp.float32)     # [nH*B, S, S]
    add_mask = (1.0 - mask_ref[...]) * -10000.0                 # [B, S]
    scores = scores + jnp.concatenate([add_mask] * nH, axis=0)[:, None, :]

    m = jnp.max(scores, axis=-1, keepdims=True)
    p = jnp.exp(scores - m)
    p = p * pl.reciprocal(jnp.sum(p, axis=-1, keepdims=True),
                          approx=True)                          # divide on EUP

    ctx = jnp.einsum("bqk,bkd->bqd", _bf16(p), v,
                     preferred_element_type=jnp.float32)        # [nH*B, S, dH]
    # heads back onto the feature axis -> ONE [T, H] @ [H, H] output projection
    ctx = jnp.concatenate([ctx[h * B:(h + 1) * B] for h in range(nH)],
                          axis=-1).reshape(T, H)
    attn = jnp.dot(_bf16(ctx), wo_ref[0],
                   preferred_element_type=jnp.float32) + bo_ref[0]
    x = _layernorm(attn + x, ln1_g_ref[0], ln1_b_ref[0])

    # ---- feed-forward + residual + LayerNorm (fused) ----
    ff = jnp.dot(_bf16(x), w1_ref[0],
                 preferred_element_type=jnp.float32) + b1_ref[0]
    ff = _gelu(ff)
    ff = jnp.dot(_bf16(ff), w2_ref[0],
                 preferred_element_type=jnp.float32) + b2_ref[0]
    x = _layernorm(ff + x, ln2_g_ref[0], ln2_b_ref[0])
    x_ref[...] = x

    # ---- regression head, once, on the [B, H] block of CLS rows ----
    @pl.when(layer == pl.num_programs(0) - 1)
    def _():
        cls = x.reshape(B, S, H)[:, 0, :]                       # [B, H]
        h1 = jnp.maximum(
            jnp.dot(_bf16(cls), cls_w_ref[...],
                    preferred_element_type=jnp.float32) + cls_b_ref[...], 0.0)
        h2 = jnp.maximum(
            jnp.dot(_bf16(h1), fc1_w_ref[...],
                    preferred_element_type=jnp.float32) + fc1_b_ref[...], 0.0)
        out_ref[...] = (jnp.dot(_bf16(h2), fc2_w_ref[...],
                                preferred_element_type=jnp.float32)
                        + fc2_b_ref[...])                       # [B, 1]


# ----------------------------- Parameters ------------------------------------

def init_params(key, cfg):
    H = cfg["hidden_size"]
    I = cfg["intermediate_size"]
    Hd = cfg["head_hidden_dim"]
    V = cfg["vocab_size"]
    P = cfg["max_position"]
    L = cfg["num_layers"]
    dH = H // cfg["num_heads"]

    keys = iter(jax.random.split(key, 16))

    def rand(shape):
        return 0.02 * jax.random.normal(next(keys), shape, jnp.float32)

    wqkv = rand((L, H, 3 * H))
    # fold the 1/sqrt(dH) attention-score scale into the Q projection weights
    wqkv = wqkv.at[:, :, :H].multiply(1.0 / math.sqrt(dH))

    return {
        # embeddings (kept f32; gathered in plain JAX)
        "word_emb": rand((V, H)),
        "pos_emb": rand((P, H)),
        "tok_emb": rand((2, H)),
        "emb_ln_g": jnp.ones((1, H), jnp.float32),
        "emb_ln_b": jnp.zeros((1, H), jnp.float32),
        # per-layer weights stacked along a leading L axis (streamed per layer)
        "wqkv": wqkv.astype(jnp.bfloat16),
        "bqkv": jnp.zeros((L, 1, 3 * H), jnp.float32),
        "wo": rand((L, H, H)).astype(jnp.bfloat16),
        "bo": jnp.zeros((L, 1, H), jnp.float32),
        "ln1_g": jnp.ones((L, 1, H), jnp.float32),
        "ln1_b": jnp.zeros((L, 1, H), jnp.float32),
        "w1": rand((L, H, I)).astype(jnp.bfloat16),
        "b1": jnp.zeros((L, 1, I), jnp.float32),
        "w2": rand((L, I, H)).astype(jnp.bfloat16),
        "b2": jnp.zeros((L, 1, H), jnp.float32),
        "ln2_g": jnp.ones((L, 1, H), jnp.float32),
        "ln2_b": jnp.zeros((L, 1, H), jnp.float32),
        # regression head (cls, fc1, fc2)
        "cls_w": rand((H, Hd)).astype(jnp.bfloat16),
        "cls_b": jnp.zeros((1, Hd), jnp.float32),
        "fc1_w": rand((Hd, Hd)).astype(jnp.bfloat16),
        "fc1_b": jnp.zeros((1, Hd), jnp.float32),
        "fc2_w": rand((Hd, 1)).astype(jnp.bfloat16),
        "fc2_b": jnp.zeros((1, 1), jnp.float32),
    }


# ----------------------------- Forward ---------------------------------------

def bert_for_regression(params, input_ids, attention_mask, cfg):
    B, S = input_ids.shape
    H, L = cfg["hidden_size"], cfg["num_layers"]

    # TODO(synk): the embedding-table row gather stays in plain JAX — a vocab
    # gather has no clean dense-tile Pallas equivalent at this size.
    emb = (jnp.take(params["word_emb"], input_ids, axis=0)
           + params["pos_emb"][:S][None, :, :]
           + params["tok_emb"][0][None, None, :]).astype(jnp.bfloat16)
    mask_f = attention_mask.astype(jnp.float32)                 # [B, S]

    per_layer = ("wqkv", "bqkv", "wo", "bo", "ln1_g", "ln1_b",
                 "w1", "b1", "w2", "b2", "ln2_g", "ln2_b")
    head_weights = ("cls_w", "cls_b", "fc1_w", "fc1_b", "fc2_w", "fc2_b")

    def const_spec(a):
        # full-array block, constant index map => fetched into VMEM once and
        # kept resident across all layer steps.
        # TODO(synk): at real BERT scale add pipeline_mode=pl.Buffered(1) so
        # these constant-index blocks are not pointlessly double-buffered.
        zeros = (0,) * a.ndim
        return pl.BlockSpec(a.shape, lambda l, _z=zeros: _z)

    def layer_spec(a):
        # one layer slice per grid step: weights stream through VMEM and the
        # automatic pipeline prefetches layer l+1 while layer l computes.
        block = (1,) + a.shape[1:]
        zeros = (0,) * (a.ndim - 1)
        return pl.BlockSpec(block, lambda l, _z=zeros: (l,) + _z)

    args = ([emb, mask_f, params["emb_ln_g"], params["emb_ln_b"]]
            + [params[n] for n in per_layer]
            + [params[n] for n in head_weights])
    in_specs = ([const_spec(emb), const_spec(mask_f),
                 const_spec(params["emb_ln_g"]), const_spec(params["emb_ln_b"])]
                + [layer_spec(params[n]) for n in per_layer]
                + [const_spec(params[n]) for n in head_weights])

    # Explicit VMEM budget: resident + double-buffered streamed weights, the
    # carried hidden state and working-set slack, clamped so it also fits the
    # 64 MiB physical VMEM of v7x.
    def nbytes(a):
        return a.size * a.dtype.itemsize

    vmem_needed = (2 * sum(nbytes(a) for a in args)
                   + 8 * B * S * H * 4 + (4 << 20))
    vmem_limit = int(min(max(vmem_needed, 32 << 20), 64 << 20))

    pred = pl.pallas_call(
        functools.partial(bert_kernel, batch=B, seq=S,
                          num_heads=cfg["num_heads"]),
        out_shape=jax.ShapeDtypeStruct((B, 1), jnp.float32),
        grid=(L,),
        in_specs=in_specs,
        out_specs=pl.BlockSpec((B, 1), lambda l: (0, 0)),
        scratch_shapes=[pltpu.VMEM((B * S, H), jnp.float32)],
        compiler_params=pltpu.CompilerParams(
            dimension_semantics=("arbitrary",),      # layer axis is sequential
            vmem_limit_bytes=vmem_limit),
    )(*args)

    return pred.reshape(B)                           # squeeze(-1) -> [B]


# ----------------------------- Main -------------------------------------------

if __name__ == "__main__":
    cfg = dict(
        vocab_size=100,
        hidden_size=32,      # synthetic BERT hidden size
        num_heads=2,
        num_layers=2,
        intermediate_size=64,
        max_position=16,
        head_hidden_dim=16,  # hidden_dim of the regression head
    )
    key = jax.random.PRNGKey(0)
    pkey, ikey = jax.random.split(key)
    params = init_params(pkey, cfg)

    B, S = 2, 8
    input_ids = jax.random.randint(ikey, (B, S), 0, cfg["vocab_size"],
                                   dtype=jnp.int32)
    attention_mask = jnp.ones((B, S), jnp.int32).at[1, 6:].set(0)

    fwd = jax.jit(lambda p, ids, m: bert_for_regression(p, ids, m, cfg))
    pred = jax.block_until_ready(fwd(params, input_ids, attention_mask))
    assert pred.shape == (B,) and pred.dtype == jnp.float32
    print("KERNEL_OK")
</pallas_src>

<mosaic_0001>
module attributes {stable_mosaic.version = 11 : i64} {
  func.func @bert_kernel(%arg0: i32, %arg1: memref<2x8x32xbf16, #tpu.memory_space<vmem>>, %arg2: memref<2x8xf32, #tpu.memory_space<vmem>>, %arg3: memref<1x32xf32, #tpu.memory_space<vmem>>, %arg4: memref<1x32xf32, #tpu.memory_space<vmem>>, %arg5: memref<1x32x96xbf16, #tpu.memory_space<vmem>>, %arg6: memref<1x1x96xf32, #tpu.memory_space<vmem>>, %arg7: memref<1x32x32xbf16, #tpu.memory_space<vmem>>, %arg8: memref<1x1x32xf32, #tpu.memory_space<vmem>>, %arg9: memref<1x1x32xf32, #tpu.memory_space<vmem>>, %arg10: memref<1x1x32xf32, #tpu.memory_space<vmem>>, %arg11: memref<1x32x64xbf16, #tpu.memory_space<vmem>>, %arg12: memref<1x1x64xf32, #tpu.memory_space<vmem>>, %arg13: memref<1x64x32xbf16, #tpu.memory_space<vmem>>, %arg14: memref<1x1x32xf32, #tpu.memory_space<vmem>>, %arg15: memref<1x1x32xf32, #tpu.memory_space<vmem>>, %arg16: memref<1x1x32xf32, #tpu.memory_space<vmem>>, %arg17: memref<32x16xbf16, #tpu.memory_space<vmem>>, %arg18: memref<1x16xf32, #tpu.memory_space<vmem>>, %arg19: memref<16x16xbf16, #tpu.memory_space<vmem>>, %arg20: memref<1x16xf32, #tpu.memory_space<vmem>>, %arg21: memref<16x1xbf16, #tpu.memory_space<vmem>>, %arg22: memref<1x1xf32, #tpu.memory_space<vmem>>, %arg23: memref<2x1xf32, #tpu.memory_space<vmem>>, %arg24: memref<16x32xf32, #tpu.memory_space<vmem>>) attributes {dimension_semantics = [#tpu.dimension_semantics<arbitrary>], iteration_bounds = array<i64: 2>, scalar_prefetch = 0 : i64, scratch_operands = 1 : i64, tpu.core_type = #tpu.core_type<tc>, window_params = [{pipeline_mode = #tpu.pipeline_mode<synchronous>, transform_indices = @transform_0, window_bounds = array<i64: 2, 8, 32>}, {pipeline_mode = #tpu.pipeline_mode<synchronous>, transform_indices = @transform_1, window_bounds = array<i64: 2, 8>}, {pipeline_mode = #tpu.pipeline_mode<synchronous>, transform_indices = @transform_2, window_bounds = array<i64: 1, 32>}, {pipeline_mode = #tpu.pipeline_mode<synchronous>, transform_indices = @transform_3, window_bounds = array<i64: 1, 32>}, {transform_indices = @transform_4, window_bounds = array<i64: 1, 32, 96>}, {transform_indices = @transform_5, window_bounds = array<i64: 1, 1, 96>}, {transform_indices = @transform_6, window_bounds = array<i64: 1, 32, 32>}, {transform_indices = @transform_7, window_bounds = array<i64: 1, 1, 32>}, {transform_indices = @transform_8, window_bounds = array<i64: 1, 1, 32>}, {transform_indices = @transform_9, window_bounds = array<i64: 1, 1, 32>}, {transform_indices = @transform_10, window_bounds = array<i64: 1, 32, 64>}, {transform_indices = @transform_11, window_bounds = array<i64: 1, 1, 64>}, {transform_indices = @transform_12, window_bounds = array<i64: 1, 64, 32>}, {transform_indices = @transform_13, window_bounds = array<i64: 1, 1, 32>}, {transform_indices = @transform_14, window_bounds = array<i64: 1, 1, 32>}, {transform_indices = @transform_15, window_bounds = array<i64: 1, 1, 32>}, {pipeline_mode = #tpu.pipeline_mode<synchronous>, transform_indices = @transform_16, window_bounds = array<i64: 32, 16>}, {pipeline_mode = #tpu.pipeline_mode<synchronous>, transform_indices = @transform_17, window_bounds = array<i64: 1, 16>}, {pipeline_mode = #tpu.pipeline_mode<synchronous>, transform_indices = @transform_18, window_bounds = array<i64: 16, 16>}, {pipeline_mode = #tpu.pipeline_mode<synchronous>, transform_indices = @transform_19, window_bounds = array<i64: 1, 16>}, {pipeline_mode = #tpu.pipeline_mode<synchronous>, transform_indices = @transform_20, window_bounds = array<i64: 16, 1>}, {pipeline_mode = #tpu.pipeline_mode<synchronous>, transform_indices = @transform_21, window_bounds = array<i64: 1, 1>}, {pipeline_mode = #tpu.pipeline_mode<synchronous>, transform_indices = @transform_22, window_bounds = array<i64: 2, 1>}]} {
    %c0_i32 = arith.constant 0 : i32
    %0 = arith.cmpi eq, %arg0, %c0_i32 : i32
    %1 = arith.extui %0 : i1 to i32
    %c0_i32_0 = arith.constant 0 : i32
    %2 = arith.cmpi ne, %1, %c0_i32_0 : i32
    scf.if %2 {
      %c0_65 = arith.constant 0 : index
      %c0_66 = arith.constant 0 : index
      %c0_67 = arith.constant 0 : index
      %146 = vector.load %arg1[%c0_65, %c0_66, %c0_67] : memref<2x8x32xbf16, #tpu.memory_space<vmem>>, vector<2x8x32xbf16>
      %147 = arith.extf %146 : vector<2x8x32xbf16> to vector<2x8x32xf32>
      %148 = vector.shape_cast %147 : vector<2x8x32xf32> to vector<16x32xf32>
      %c0_68 = arith.constant 0 : index
      %c0_69 = arith.constant 0 : index
      %149 = vector.load %arg3[%c0_68, %c0_69] : memref<1x32xf32, #tpu.memory_space<vmem>>, vector<1x32xf32>
      %c0_70 = arith.constant 0 : index
      %c0_71 = arith.constant 0 : index
      %150 = vector.load %arg4[%c0_70, %c0_71] : memref<1x32xf32, #tpu.memory_space<vmem>>, vector<1x32xf32>
      %cst_72 = arith.constant dense<0.000000e+00> : vector<16xf32>
      %151 = vector.multi_reduction <add>, %148, %cst_72 [1] : vector<16x32xf32> to vector<16xf32>
      %152 = vector.shape_cast %151 : vector<16xf32> to vector<16x1xf32>
      %cst_73 = arith.constant 3.200000e+01 : f32
      %153 = vector.broadcast %cst_73 : f32 to vector<16x1xf32>
      %154 = arith.divf %152, %153 : vector<16x1xf32>
      %155 = vector.broadcast %154 : vector<16x1xf32> to vector<16x32xf32>
      %156 = arith.subf %148, %155 : vector<16x32xf32>
      %157 = arith.mulf %156, %156 : vector<16x32xf32>
      %cst_74 = arith.constant dense<0.000000e+00> : vector<16xf32>
      %158 = vector.multi_reduction <add>, %157, %cst_74 [1] : vector<16x32xf32> to vector<16xf32>
      %159 = vector.shape_cast %158 : vector<16xf32> to vector<16x1xf32>
      %cst_75 = arith.constant 3.200000e+01 : f32
      %160 = vector.broadcast %cst_75 : f32 to vector<16x1xf32>
      %161 = arith.divf %159, %160 : vector<16x1xf32>
      %162 = vector.broadcast %154 : vector<16x1xf32> to vector<16x32xf32>
      %163 = arith.subf %148, %162 : vector<16x32xf32>
      %cst_76 = arith.constant 9.99999996E-13 : f32
      %164 = vector.broadcast %cst_76 : f32 to vector<16x1xf32>
      %165 = arith.addf %161, %164 : vector<16x1xf32>
      %166 = math.rsqrt %165 : vector<16x1xf32>
      %167 = vector.broadcast %166 : vector<16x1xf32> to vector<16x32xf32>
      %168 = arith.mulf %163, %167 : vector<16x32xf32>
      %169 = vector.broadcast %149 : vector<1x32xf32> to vector<16x32xf32>
      %170 = arith.mulf %168, %169 : vector<16x32xf32>
      %171 = vector.broadcast %150 : vector<1x32xf32> to vector<16x32xf32>
      %172 = arith.addf %170, %171 : vector<16x32xf32>
      %c0_77 = arith.constant 0 : index
      %c0_78 = arith.constant 0 : index
      %173 = vector.load %arg24[%c0_77, %c0_78] : memref<16x32xf32, #tpu.memory_space<vmem>>, vector<16x32xf32>
      tpu.vector_store %arg24[%c0_77, %c0_78], %172 {strides = array<i32>} : memref<16x32xf32, #tpu.memory_space<vmem>>, vector<16x32xf32>,
    } else {
    }
    %c0 = arith.constant 0 : index
    %c0_1 = arith.constant 0 : index
    %3 = vector.load %arg24[%c0, %c0_1] : memref<16x32xf32, #tpu.memory_space<vmem>>, vector<16x32xf32>
    %4 = arith.truncf %3 : vector<16x32xf32> to vector<16x32xbf16>
    %c0_2 = arith.constant 0 : index
    %c0_3 = arith.constant 0 : index
    %c0_4 = arith.constant 0 : index
    %5 = vector.load %arg5[%c0_2, %c0_3, %c0_4] : memref<1x32x96xbf16, #tpu.memory_space<vmem>>, vector<1x32x96xbf16>
    %6 = vector.shape_cast %5 : vector<1x32x96xbf16> to vector<32x96xbf16>
    %cst = arith.constant dense<0.000000e+00> : vector<16x96xf32>
    %7 = tpu.matmul %4, %6, %cst {dimension_numbers = #tpu.dot_dimension_numbers<[1], [0], [0], [1], [0, 0, 1, 1], [], []>} : vector<16x32xbf16>, vector<32x96xbf16>, vector<16x96xf32> -> vector<16x96xf32>
    %c0_5 = arith.constant 0 : index
    %c0_6 = arith.constant 0 : index
    %c0_7 = arith.constant 0 : index
    %8 = vector.load %arg6[%c0_5, %c0_6, %c0_7] : memref<1x1x96xf32, #tpu.memory_space<vmem>>, vector<1x1x96xf32>
    %9 = vector.shape_cast %8 : vector<1x1x96xf32> to vector<1x96xf32>
    %10 = vector.broadcast %9 : vector<1x96xf32> to vector<16x96xf32>
    %11 = arith.addf %7, %10 : vector<16x96xf32>
    %12 = vector.extract_strided_slice %11 {offsets = [0, 0], sizes = [16, 16], strides = [1, 1]} : vector<16x96xf32> to vector<16x16xf32>
    %13 = vector.shape_cast %12 : vector<16x16xf32> to vector<2x8x16xf32>
    %14 = vector.extract_strided_slice %11 {offsets = [0, 16], sizes = [16, 16], strides = [1, 1]} : vector<16x96xf32> to vector<16x16xf32>
    %15 = vector.shape_cast %14 : vector<16x16xf32> to vector<2x8x16xf32>
    %16 = tpu.concatenate %13, %15 in 0 : vector<2x8x16xf32>, vector<2x8x16xf32> -> vector<4x8x16xf32>
    %17 = arith.truncf %16 : vector<4x8x16xf32> to vector<4x8x16xbf16>
    %18 = vector.extract_strided_slice %11 {offsets = [0, 32], sizes = [16, 16], strides = [1, 1]} : vector<16x96xf32> to vector<16x16xf32>
    %19 = vector.shape_cast %18 : vector<16x16xf32> to vector<2x8x16xf32>
    %20 = vector.extract_strided_slice %11 {offsets = [0, 48], sizes = [16, 16], strides = [1, 1]} : vector<16x96xf32> to vector<16x16xf32>
    %21 = vector.shape_cast %20 : vector<16x16xf32> to vector<2x8x16xf32>
    %22 = tpu.concatenate %19, %21 in 0 : vector<2x8x16xf32>, vector<2x8x16xf32> -> vector<4x8x16xf32>
    %23 = arith.truncf %22 : vector<4x8x16xf32> to vector<4x8x16xbf16>
    %24 = vector.extract_strided_slice %11 {offsets = [0, 64], sizes = [16, 16], strides = [1, 1]} : vector<16x96xf32> to vector<16x16xf32>
    %25 = vector.shape_cast %24 : vector<16x16xf32> to vector<2x8x16xf32>
    %26 = vector.extract_strided_slice %11 {offsets = [0, 80], sizes = [16, 16], strides = [1, 1]} : vector<16x96xf32> to vector<16x16xf32>
    %27 = vector.shape_cast %26 : vector<16x16xf32> to vector<2x8x16xf32>
    %28 = tpu.concatenate %25, %27 in 0 : vector<2x8x16xf32>, vector<2x8x16xf32> -> vector<4x8x16xf32>
    %29 = arith.truncf %28 : vector<4x8x16xf32> to vector<4x8x16xbf16>
    "tpu.trace_start"() <{level = 10 : i32, message = "bqd,bkd->bqk"}> : () -> ()
    %cst_8 = arith.constant dense<0.000000e+00> : vector<4x8x8xf32>
    %30 = tpu.matmul %17, %23, %cst_8 {dimension_numbers = #tpu.dot_dimension_numbers<[2], [2], [1], [1], [0, 0, 0, 1, 1, 1], [0], [0]>} : vector<4x8x16xbf16>, vector<4x8x16xbf16>, vector<4x8x8xf32> -> vector<4x8x8xf32>
    "tpu.trace_stop"() : () -> ()
    %c0_9 = arith.constant 0 : index
    %c0_10 = arith.constant 0 : index
    %31 = vector.load %arg2[%c0_9, %c0_10] : memref<2x8xf32, #tpu.memory_space<vmem>>, vector<2x8xf32>
    %cst_11 = arith.constant 1.000000e+00 : f32
    %32 = vector.broadcast %cst_11 : f32 to vector<2x8xf32>
    %33 = arith.subf %32, %31 : vector<2x8xf32>
    %cst_12 = arith.constant -1.000000e+04 : f32
    %34 = vector.broadcast %cst_12 : f32 to vector<2x8xf32>
    %35 = arith.mulf %33, %34 : vector<2x8xf32>
    %36 = tpu.concatenate %35, %35 in 0 : vector<2x8xf32>, vector<2x8xf32> -> vector<4x8xf32>
    %37 = vector.shape_cast %36 : vector<4x8xf32> to vector<4x1x8xf32>
    %38 = vector.broadcast %37 : vector<4x1x8xf32> to vector<4x8x8xf32>
    %39 = arith.addf %30, %38 : vector<4x8x8xf32>
    %cst_13 = arith.constant dense<0xFF800000> : vector<4x8xf32>
    %40 = vector.multi_reduction <maximumf>, %39, %cst_13 [2] : vector<4x8x8xf32> to vector<4x8xf32>
    %41 = vector.shape_cast %40 : vector<4x8xf32> to vector<4x8x1xf32>
    %42 = vector.broadcast %41 : vector<4x8x1xf32> to vector<4x8x8xf32>
    %43 = arith.subf %39, %42 : vector<4x8x8xf32>
    %44 = math.exp %43 : vector<4x8x8xf32>
    %cst_14 = arith.constant dense<0.000000e+00> : vector<4x8xf32>
    %45 = vector.multi_reduction <add>, %44, %cst_14 [2] : vector<4x8x8xf32> to vector<4x8xf32>
    %46 = vector.shape_cast %45 : vector<4x8xf32> to vector<4x8x1xf32>
    %47 = tpu.reciprocal %46 {approx = true} : vector<4x8x1xf32> -> vector<4x8x1xf32>
    %48 = vector.broadcast %47 : vector<4x8x1xf32> to vector<4x8x8xf32>
    %49 = arith.mulf %44, %48 : vector<4x8x8xf32>
    %50 = arith.truncf %49 : vector<4x8x8xf32> to vector<4x8x8xbf16>
    "tpu.trace_start"() <{level = 10 : i32, message = "bqk,bkd->bqd"}> : () -> ()
    %cst_15 = arith.constant dense<0.000000e+00> : vector<4x8x16xf32>
    %51 = tpu.matmul %50, %29, %cst_15 {dimension_numbers = #tpu.dot_dimension_numbers<[2], [1], [1], [2], [0, 0, 0, 1, 1, 2], [0], [0]>} : vector<4x8x8xbf16>, vector<4x8x16xbf16>, vector<4x8x16xf32> -> vector<4x8x16xf32>
    "tpu.trace_stop"() : () -> ()
    %52 = vector.extract_strided_slice %51 {offsets = [0, 0, 0], sizes = [2, 8, 16], strides = [1, 1, 1]} : vector<4x8x16xf32> to vector<2x8x16xf32>
    %53 = vector.extract_strided_slice %51 {offsets = [2, 0, 0], sizes = [2, 8, 16], strides = [1, 1, 1]} : vector<4x8x16xf32> to vector<2x8x16xf32>
    %54 = tpu.concatenate %52, %53 in 2 : vector<2x8x16xf32>, vector<2x8x16xf32> -> vector<2x8x32xf32>
    %55 = vector.shape_cast %54 : vector<2x8x32xf32> to vector<16x32xf32>
    %56 = arith.truncf %55 : vector<16x32xf32> to vector<16x32xbf16>
    %c0_16 = arith.constant 0 : index
    %c0_17 = arith.constant 0 : index
    %c0_18 = arith.constant 0 : index
    %57 = vector.load %arg7[%c0_16, %c0_17, %c0_18] : memref<1x32x32xbf16, #tpu.memory_space<vmem>>, vector<1x32x32xbf16>
    %58 = vector.shape_cast %57 : vector<1x32x32xbf16> to vector<32x32xbf16>
    %cst_19 = arith.constant dense<0.000000e+00> : vector<16x32xf32>
    %59 = tpu.matmul %56, %58, %cst_19 {dimension_numbers = #tpu.dot_dimension_numbers<[1], [0], [0], [1], [0, 0, 1, 1], [], []>} : vector<16x32xbf16>, vector<32x32xbf16>, vector<16x32xf32> -> vector<16x32xf32>
    %c0_20 = arith.constant 0 : index
    %c0_21 = arith.constant 0 : index
    %c0_22 = arith.constant 0 : index
    %60 = vector.load %arg8[%c0_20, %c0_21, %c0_22] : memref<1x1x32xf32, #tpu.memory_space<vmem>>, vector<1x1x32xf32>
    %61 = vector.shape_cast %60 : vector<1x1x32xf32> to vector<1x32xf32>
    %62 = vector.broadcast %61 : vector<1x32xf32> to vector<16x32xf32>
    %63 = arith.addf %59, %62 : vector<16x32xf32>
    %64 = arith.addf %63, %3 : vector<16x32xf32>
    %c0_23 = arith.constant 0 : index
    %c0_24 = arith.constant 0 : index
    %c0_25 = arith.constant 0 : index
    %65 = vector.load %arg9[%c0_23, %c0_24, %c0_25] : memref<1x1x32xf32, #tpu.memory_space<vmem>>, vector<1x1x32xf32>
    %66 = vector.shape_cast %65 : vector<1x1x32xf32> to vector<1x32xf32>
    %c0_26 = arith.constant 0 : index
    %c0_27 = arith.constant 0 : index
    %c0_28 = arith.constant 0 : index
    %67 = vector.load %arg10[%c0_26, %c0_27, %c0_28] : memref<1x1x32xf32, #tpu.memory_space<vmem>>, vector<1x1x32xf32>
    %68 = vector.shape_cast %67 : vector<1x1x32xf32> to vector<1x32xf32>
    %cst_29 = arith.constant dense<0.000000e+00> : vector<16xf32>
    %69 = vector.multi_reduction <add>, %64, %cst_29 [1] : vector<16x32xf32> to vector<16xf32>
    %70 = vector.shape_cast %69 : vector<16xf32> to vector<16x1xf32>
    %cst_30 = arith.constant 3.200000e+01 : f32
    %71 = vector.broadcast %cst_30 : f32 to vector<16x1xf32>
    %72 = arith.divf %70, %71 : vector<16x1xf32>
    %73 = vector.broadcast %72 : vector<16x1xf32> to vector<16x32xf32>
    %74 = arith.subf %64, %73 : vector<16x32xf32>
    %75 = arith.mulf %74, %74 : vector<16x32xf32>
    %cst_31 = arith.constant dense<0.000000e+00> : vector<16xf32>
    %76 = vector.multi_reduction <add>, %75, %cst_31 [1] : vector<16x32xf32> to vector<16xf32>
    %77 = vector.shape_cast %76 : vector<16xf32> to vector<16x1xf32>
    %cst_32 = arith.constant 3.200000e+01 : f32
    %78 = vector.broadcast %cst_32 : f32 to vector<16x1xf32>
    %79 = arith.divf %77, %78 : vector<16x1xf32>
    %80 = vector.broadcast %72 : vector<16x1xf32> to vector<16x32xf32>
    %81 = arith.subf %64, %80 : vector<16x32xf32>
    %cst_33 = arith.constant 9.99999996E-13 : f32
    %82 = vector.broadcast %cst_33 : f32 to vector<16x1xf32>
    %83 = arith.addf %79, %82 : vector<16x1xf32>
    %84 = math.rsqrt %83 : vector<16x1xf32>
    %85 = vector.broadcast %84 : vector<16x1xf32> to vector<16x32xf32>
    %86 = arith.mulf %81, %85 : vector<16x32xf32>
    %87 = vector.broadcast %66 : vector<1x32xf32> to vector<16x32xf32>
    %88 = arith.mulf %86, %87 : vector<16x32xf32>
    %89 = vector.broadcast %68 : vector<1x32xf32> to vector<16x32xf32>
    %90 = arith.addf %88, %89 : vector<16x32xf32>
    %91 = arith.truncf %90 : vector<16x32xf32> to vector<16x32xbf16>
    %c0_34 = arith.constant 0 : index
    %c0_35 = arith.constant 0 : index
    %c0_36 = arith.constant 0 : index
    %92 = vector.load %arg11[%c0_34, %c0_35, %c0_36] : memref<1x32x64xbf16, #tpu.memory_space<vmem>>, vector<1x32x64xbf16>
    %93 = vector.shape_cast %92 : vector<1x32x64xbf16> to vector<32x64xbf16>
    %cst_37 = arith.constant dense<0.000000e+00> : vector<16x64xf32>
    %94 = tpu.matmul %91, %93, %cst_37 {dimension_numbers = #tpu.dot_dimension_numbers<[1], [0], [0], [1], [0, 0, 1, 1], [], []>} : vector<16x32xbf16>, vector<32x64xbf16>, vector<16x64xf32> -> vector<16x64xf32>
    %c0_38 = arith.constant 0 : index
    %c0_39 = arith.constant 0 : index
    %c0_40 = arith.constant 0 : index
    %95 = vector.load %arg12[%c0_38, %c0_39, %c0_40] : memref<1x1x64xf32, #tpu.memory_space<vmem>>, vector<1x1x64xf32>
    %96 = vector.shape_cast %95 : vector<1x1x64xf32> to vector<1x64xf32>
    %97 = vector.broadcast %96 : vector<1x64xf32> to vector<16x64xf32>
    %98 = arith.addf %94, %97 : vector<16x64xf32>
    %cst_41 = arith.constant 5.000000e-01 : f32
    %99 = vector.broadcast %cst_41 : f32 to vector<16x64xf32>
    %100 = arith.mulf %99, %98 : vector<16x64xf32>
    %cst_42 = arith.constant 0.707106769 : f32
    %101 = vector.broadcast %cst_42 : f32 to vector<16x64xf32>
    %102 = arith.mulf %98, %101 : vector<16x64xf32>
    %103 = math.erf %102 : vector<16x64xf32>
    %cst_43 = arith.constant 1.000000e+00 : f32
    %104 = vector.broadcast %cst_43 : f32 to vector<16x64xf32>
    %105 = arith.addf %104, %103 : vector<16x64xf32>
    %106 = arith.mulf %100, %105 : vector<16x64xf32>
    %107 = arith.truncf %106 : vector<16x64xf32> to vector<16x64xbf16>
    %c0_44 = arith.constant 0 : index
    %c0_45 = arith.constant 0 : index
    %c0_46 = arith.constant 0 : index
    %108 = vector.load %arg13[%c0_44, %c0_45, %c0_46] : memref<1x64x32xbf16, #tpu.memory_space<vmem>>, vector<1x64x32xbf16>
    %109 = vector.shape_cast %108 : vector<1x64x32xbf16> to vector<64x32xbf16>
    %cst_47 = arith.constant dense<0.000000e+00> : vector<16x32xf32>
    %110 = tpu.matmul %107, %109, %cst_47 {dimension_numbers = #tpu.dot_dimension_numbers<[1], [0], [0], [1], [0, 0, 1, 1], [], []>} : vector<16x64xbf16>, vector<64x32xbf16>, vector<16x32xf32> -> vector<16x32xf32>
    %c0_48 = arith.constant 0 : index
    %c0_49 = arith.constant 0 : index
    %c0_50 = arith.constant 0 : index
    %111 = vector.load %arg14[%c0_48, %c0_49, %c0_50] : memref<1x1x32xf32, #tpu.memory_space<vmem>>, vector<1x1x32xf32>
    %112 = vector.shape_cast %111 : vector<1x1x32xf32> to vector<1x32xf32>
    %113 = vector.broadcast %112 : vector<1x32xf32> to vector<16x32xf32>
    %114 = arith.addf %110, %113 : vector<16x32xf32>
    %115 = arith.addf %114, %90 : vector<16x32xf32>
    %c0_51 = arith.constant 0 : index
    %c0_52 = arith.constant 0 : index
    %c0_53 = arith.constant 0 : index
    %116 = vector.load %arg15[%c0_51, %c0_52, %c0_53] : memref<1x1x32xf32, #tpu.memory_space<vmem>>, vector<1x1x32xf32>
    %117 = vector.shape_cast %116 : vector<1x1x32xf32> to vector<1x32xf32>
    %c0_54 = arith.constant 0 : index
    %c0_55 = arith.constant 0 : index
    %c0_56 = arith.constant 0 : index
    %118 = vector.load %arg16[%c0_54, %c0_55, %c0_56] : memref<1x1x32xf32, #tpu.memory_space<vmem>>, vector<1x1x32xf32>
    %119 = vector.shape_cast %118 : vector<1x1x32xf32> to vector<1x32xf32>
    %cst_57 = arith.constant dense<0.000000e+00> : vector<16xf32>
    %120 = vector.multi_reduction <add>, %115, %cst_57 [1] : vector<16x32xf32> to vector<16xf32>
    %121 = vector.shape_cast %120 : vector<16xf32> to vector<16x1xf32>
    %cst_58 = arith.constant 3.200000e+01 : f32
    %122 = vector.broadcast %cst_58 : f32 to vector<16x1xf32>
    %123 = arith.divf %121, %122 : vector<16x1xf32>
    %124 = vector.broadcast %123 : vector<16x1xf32> to vector<16x32xf32>
    %125 = arith.subf %115, %124 : vector<16x32xf32>
    %126 = arith.mulf %125, %125 : vector<16x32xf32>
    %cst_59 = arith.constant dense<0.000000e+00> : vector<16xf32>
    %127 = vector.multi_reduction <add>, %126, %cst_59 [1] : vector<16x32xf32> to vector<16xf32>
    %128 = vector.shape_cast %127 : vector<16xf32> to vector<16x1xf32>
    %cst_60 = arith.constant 3.200000e+01 : f32
    %129 = vector.broadcast %cst_60 : f32 to vector<16x1xf32>
    %130 = arith.divf %128, %129 : vector<16x1xf32>
    %131 = vector.broadcast %123 : vector<16x1xf32> to vector<16x32xf32>
    %132 = arith.subf %115, %131 : vector<16x32xf32>
    %cst_61 = arith.constant 9.99999996E-13 : f32
    %133 = vector.broadcast %cst_61 : f32 to vector<16x1xf32>
    %134 = arith.addf %130, %133 : vector<16x1xf32>
    %135 = math.rsqrt %134 : vector<16x1xf32>
    %136 = vector.broadcast %135 : vector<16x1xf32> to vector<16x32xf32>
    %137 = arith.mulf %132, %136 : vector<16x32xf32>
    %138 = vector.broadcast %117 : vector<1x32xf32> to vector<16x32xf32>
    %139 = arith.mulf %137, %138 : vector<16x32xf32>
    %140 = vector.broadcast %119 : vector<1x32xf32> to vector<16x32xf32>
    %141 = arith.addf %139, %140 : vector<16x32xf32>
    %c0_62 = arith.constant 0 : index
    %c0_63 = arith.constant 0 : index
    %142 = vector.load %arg24[%c0_62, %c0_63] : memref<16x32xf32, #tpu.memory_space<vmem>>, vector<16x32xf32>
    tpu.vector_store %arg24[%c0_62, %c0_63], %141 {strides = array<i32>} : memref<16x32xf32, #tpu.memory_space<vmem>>, vector<16x32xf32>,
    %c1_i32 = arith.constant 1 : i32
    %143 = arith.cmpi eq, %arg0, %c1_i32 : i32
    %144 = arith.extui %143 : i1 to i32
    %c0_i32_64 = arith.constant 0 : i32
    %145 = arith.cmpi ne, %144, %c0_i32_64 : i32
    scf.if %145 {
      %146 = vector.shape_cast %141 : vector<16x32xf32> to vector<2x8x32xf32>
      %147 = vector.extract_strided_slice %146 {offsets = [0, 0, 0], sizes = [2, 1, 32], strides = [1, 1, 1]} : vector<2x8x32xf32> to vector<2x1x32xf32>
      %148 = vector.shape_cast %147 : vector<2x1x32xf32> to vector<2x32xf32>
      %149 = arith.truncf %148 : vector<2x32xf32> to vector<2x32xbf16>
      %c0_65 = arith.constant 0 : index
      %c0_66 = arith.constant 0 : index
      %150 = vector.load %arg17[%c0_65, %c0_66] : memref<32x16xbf16, #tpu.memory_space<vmem>>, vector<32x16xbf16>
      %cst_67 = arith.constant dense<0.000000e+00> : vector<2x16xf32>
      %151 = tpu.matmul %149, %150, %cst_67 {dimension_numbers = #tpu.dot_dimension_numbers<[1], [0], [0], [1], [0, 0, 1, 1], [], []>} : vector<2x32xbf16>, vector<32x16xbf16>, vector<2x16xf32> -> vector<2x16xf32>
      %c0_68 = arith.constant 0 : index
      %c0_69 = arith.constant 0 : index
      %152 = vector.load %arg18[%c0_68, %c0_69] : memref<1x16xf32, #tpu.memory_space<vmem>>, vector<1x16xf32>
      %153 = vector.broadcast %152 : vector<1x16xf32> to vector<2x16xf32>
      %154 = arith.addf %151, %153 : vector<2x16xf32>
      %cst_70 = arith.constant 0.000000e+00 : f32
      %155 = vector.broadcast %cst_70 : f32 to vector<2x16xf32>
      %156 = arith.maximumf %154, %155 : vector<2x16xf32>
      %157 = arith.truncf %156 : vector<2x16xf32> to vector<2x16xbf16>
      %c0_71 = arith.constant 0 : index
      %c0_72 = arith.constant 0 : index
      %158 = vector.load %arg19[%c0_71, %c0_72] : memref<16x16xbf16, #tpu.memory_space<vmem>>, vector<16x16xbf16>
      %cst_73 = arith.constant dense<0.000000e+00> : vector<2x16xf32>
      %159 = tpu.matmul %157, %158, %cst_73 {dimension_numbers = #tpu.dot_dimension_numbers<[1], [0], [0], [1], [0, 0, 1, 1], [], []>} : vector<2x16xbf16>, vector<16x16xbf16>, vector<2x16xf32> -> vector<2x16xf32>
      %c0_74 = arith.constant 0 : index
      %c0_75 = arith.constant 0 : index
      %160 = vector.load %arg20[%c0_74, %c0_75] : memref<1x16xf32, #tpu.memory_space<vmem>>, vector<1x16xf32>
      %161 = vector.broadcast %160 : vector<1x16xf32> to vector<2x16xf32>
      %162 = arith.addf %159, %161 : vector<2x16xf32>
      %cst_76 = arith.constant 0.000000e+00 : f32
      %163 = vector.broadcast %cst_76 : f32 to vector<2x16xf32>
      %164 = arith.maximumf %162, %163 : vector<2x16xf32>
      %165 = arith.truncf %164 : vector<2x16xf32> to vector<2x16xbf16>
      %c0_77 = arith.constant 0 : index
      %c0_78 = arith.constant 0 : index
      %166 = vector.load %arg21[%c0_77, %c0_78] : memref<16x1xbf16, #tpu.memory_space<vmem>>, vector<16x1xbf16>
      %cst_79 = arith.constant dense<0.000000e+00> : vector<2x1xf32>
      %167 = tpu.matmul %165, %166, %cst_79 {dimension_numbers = #tpu.dot_dimension_numbers<[1], [0], [0], [1], [0, 0, 1, 1], [], []>} : vector<2x16xbf16>, vector<16x1xbf16>, vector<2x1xf32> -> vector<2x1xf32>
      %c0_80 = arith.constant 0 : index
      %c0_81 = arith.constant 0 : index
      %168 = vector.load %arg22[%c0_80, %c0_81] : memref<1x1xf32, #tpu.memory_space<vmem>>, vector<1x1xf32>
      %169 = vector.broadcast %168 : vector<1x1xf32> to vector<2x1xf32>
      %170 = arith.addf %167, %169 : vector<2x1xf32>
      %c0_82 = arith.constant 0 : index
      %c0_83 = arith.constant 0 : index
      %171 = vector.load %arg23[%c0_82, %c0_83] : memref<2x1xf32, #tpu.memory_space<vmem>>, vector<2x1xf32>
      tpu.vector_store %arg23[%c0_82, %c0_83], %170 {strides = array<i32>} : memref<2x1xf32, #tpu.memory_space<vmem>>, vector<2x1xf32>,
    } else {
    }
    return
  }
  func.func @transform_0(%arg0: i32) -> (i32, i32, i32) {
    %c0_i32 = arith.constant 0 : i32
    %c0_i32_0 = arith.constant 0 : i32
    %c0_i32_1 = arith.constant 0 : i32
    %c0_i32_2 = arith.constant 0 : i32
    return %c0_i32, %c0_i32_0, %c0_i32_1 : i32, i32, i32
  }
  func.func @transform_1(%arg0: i32) -> (i32, i32) {
    %c0_i32 = arith.constant 0 : i32
    %c0_i32_0 = arith.constant 0 : i32
    %c0_i32_1 = arith.constant 0 : i32
    return %c0_i32, %c0_i32_0 : i32, i32
  }
  func.func @transform_2(%arg0: i32) -> (i32, i32) {
    %c0_i32 = arith.constant 0 : i32
    %c0_i32_0 = arith.constant 0 : i32
    %c0_i32_1 = arith.constant 0 : i32
    return %c0_i32, %c0_i32_0 : i32, i32
  }
  func.func @transform_3(%arg0: i32) -> (i32, i32) {
    %c0_i32 = arith.constant 0 : i32
    %c0_i32_0 = arith.constant 0 : i32
    %c0_i32_1 = arith.constant 0 : i32
    return %c0_i32, %c0_i32_0 : i32, i32
  }
  func.func @transform_4(%arg0: i32) -> (i32, i32, i32) {
    %c0_i32 = arith.constant 0 : i32
    %c0_i32_0 = arith.constant 0 : i32
    %c0_i32_1 = arith.constant 0 : i32
    return %arg0, %c0_i32, %c0_i32_0 : i32, i32, i32
  }
  func.func @transform_5(%arg0: i32) -> (i32, i32, i32) {
    %c0_i32 = arith.constant 0 : i32
    %c0_i32_0 = arith.constant 0 : i32
    %c0_i32_1 = arith.constant 0 : i32
    return %arg0, %c0_i32, %c0_i32_0 : i32, i32, i32
  }
  func.func @transform_6(%arg0: i32) -> (i32, i32, i32) {
    %c0_i32 = arith.constant 0 : i32
    %c0_i32_0 = arith.constant 0 : i32
    %c0_i32_1 = arith.constant 0 : i32
    return %arg0, %c0_i32, %c0_i32_0 : i32, i32, i32
  }
  func.func @transform_7(%arg0: i32) -> (i32, i32, i32) {
    %c0_i32 = arith.constant 0 : i32
    %c0_i32_0 = arith.constant 0 : i32
    %c0_i32_1 = arith.constant 0 : i32
    return %arg0, %c0_i32, %c0_i32_0 : i32, i32, i32
  }
  func.func @transform_8(%arg0: i32) -> (i32, i32, i32) {
    %c0_i32 = arith.constant 0 : i32
    %c0_i32_0 = arith.constant 0 : i32
    %c0_i32_1 = arith.constant 0 : i32
    return %arg0, %c0_i32, %c0_i32_0 : i32, i32, i32
  }
  func.func @transform_9(%arg0: i32) -> (i32, i32, i32) {
    %c0_i32 = arith.constant 0 : i32
    %c0_i32_0 = arith.constant 0 : i32
    %c0_i32_1 = arith.constant 0 : i32
    return %arg0, %c0_i32, %c0_i32_0 : i32, i32, i32
  }
  func.func @transform_10(%arg0: i32) -> (i32, i32, i32) {
    %c0_i32 = arith.constant 0 : i32
    %c0_i32_0 = arith.constant 0 : i32
    %c0_i32_1 = arith.constant 0 : i32
    return %arg0, %c0_i32, %c0_i32_0 : i32, i32, i32
  }
  func.func @transform_11(%arg0: i32) -> (i32, i32, i32) {
    %c0_i32 = arith.constant 0 : i32
    %c0_i32_0 = arith.constant 0 : i32
    %c0_i32_1 = arith.constant 0 : i32
    return %arg0, %c0_i32, %c0_i32_0 : i32, i32, i32
  }
  func.func @transform_12(%arg0: i32) -> (i32, i32, i32) {
    %c0_i32 = arith.constant 0 : i32
    %c0_i32_0 = arith.constant 0 : i32
    %c0_i32_1 = arith.constant 0 : i32
    return %arg0, %c0_i32, %c0_i32_0 : i32, i32, i32
  }
  func.func @transform_13(%arg0: i32) -> (i32, i32, i32) {
    %c0_i32 = arith.constant 0 : i32
    %c0_i32_0 = arith.constant 0 : i32
    %c0_i32_1 = arith.constant 0 : i32
    return %arg0, %c0_i32, %c0_i32_0 : i32, i32, i32
  }
  func.func @transform_14(%arg0: i32) -> (i32, i32, i32) {
    %c0_i32 = arith.constant 0 : i32
    %c0_i32_0 = arith.constant 0 : i32
    %c0_i32_1 = arith.constant 0 : i32
    return %arg0, %c0_i32, %c0_i32_0 : i32, i32, i32
  }
  func.func @transform_15(%arg0: i32) -> (i32, i32, i32) {
    %c0_i32 = arith.constant 0 : i32
    %c0_i32_0 = arith.constant 0 : i32
    %c0_i32_1 = arith.constant 0 : i32
    return %arg0, %c0_i32, %c0_i32_0 : i32, i32, i32
  }
  func.func @transform_16(%arg0: i32) -> (i32, i32) {
    %c0_i32 = arith.constant 0 : i32
    %c0_i32_0 = arith.constant 0 : i32
    %c0_i32_1 = arith.constant 0 : i32
    return %c0_i32, %c0_i32_0 : i32, i32
  }
  func.func @transform_17(%arg0: i32) -> (i32, i32) {
    %c0_i32 = arith.constant 0 : i32
    %c0_i32_0 = arith.constant 0 : i32
    %c0_i32_1 = arith.constant 0 : i32
    return %c0_i32, %c0_i32_0 : i32, i32
  }
  func.func @transform_18(%arg0: i32) -> (i32, i32) {
    %c0_i32 = arith.constant 0 : i32
    %c0_i32_0 = arith.constant 0 : i32
    %c0_i32_1 = arith.constant 0 : i32
    return %c0_i32, %c0_i32_0 : i32, i32
  }
  func.func @transform_19(%arg0: i32) -> (i32, i32) {
    %c0_i32 = arith.constant 0 : i32
    %c0_i32_0 = arith.constant 0 : i32
    %c0_i32_1 = arith.constant 0 : i32
    return %c0_i32, %c0_i32_0 : i32, i32
  }
  func.func @transform_20(%arg0: i32) -> (i32, i32) {
    %c0_i32 = arith.constant 0 : i32
    %c0_i32_0 = arith.constant 0 : i32
    %c0_i32_1 = arith.constant 0 : i32
    return %c0_i32, %c0_i32_0 : i32, i32
  }
  func.func @transform_21(%arg0: i32) -> (i32, i32) {
    %c0_i32 = arith.constant 0 : i32
    %c0_i32_0 = arith.constant 0 : i32
    %c0_i32_1 = arith.constant 0 : i32
    return %c0_i32, %c0_i32_0 : i32, i32
  }
  func.func @transform_22(%arg0: i32) -> (i32, i32) {
    %c0_i32 = arith.constant 0 : i32
    %c0_i32_0 = arith.constant 0 : i32
    %c0_i32_1 = arith.constant 0 : i32
    return %c0_i32, %c0_i32_0 : i32, i32
  }
}

</mosaic_0001>

<llo_original>
// kernel: _lambda_.1
$region0: #{_lambda_.1}
  #allocation0 [shape = 'u32[]', space=smem, size = 0x4, offset = 0x4, fixed_abs, tag = 'smem constant byte address 0x4 - core index']
  #allocation1 [shape = 'u32[144,128]{1,0:T(1,128)}', space=vmem, size = 0x12000, scoped, tag = 'internal scratch']
  #allocation2 [shape = 'f32[16,32]{1,0:T(8,128)}', space=vmem, size = 0x2000, scoped, tag = 'scratch operand']
  #allocation3 [shape = 'f32[1,1]{1,0:T(1,128)S(1)}', space=vmem, size = 0x200, scoped, tag = 'scoped memory for _lambda_.1']
  %s0 = inlined_call_operand.vmem [shape: bf16[2,8,32], index: 0, kind: input, shape index: {}]
  %s1 = inlined_call_operand.vmem [shape: f32[2,8], index: 1, kind: input, shape index: {}]
  %s2 = inlined_call_operand.vmem [shape: f32[1,32], index: 2, kind: input, shape index: {}]
  %s3 = inlined_call_operand.vmem [shape: f32[1,32], index: 3, kind: input, shape index: {}]
  %s4 = inlined_call_operand.vmem [shape: bf16[2,32,96], index: 4, kind: input, shape index: {}]
  %s5 = inlined_call_operand.vmem [shape: f32[2,1,96], index: 5, kind: input, shape index: {}]
  %s6 = inlined_call_operand.vmem [shape: bf16[2,32,32], index: 6, kind: input, shape index: {}]
  %s7 = inlined_call_operand.vmem [shape: f32[2,1,32], index: 7, kind: input, shape index: {}]
  %s8 = inlined_call_operand.vmem [shape: f32[2,1,32], index: 8, kind: input, shape index: {}]
  %s9 = inlined_call_operand.vmem [shape: f32[2,1,32], index: 9, kind: input, shape index: {}]
  %s10 = inlined_call_operand.vmem [shape: bf16[2,32,64], index: 10, kind: input, shape index: {}]
  %s11 = inlined_call_operand.vmem [shape: f32[2,1,64], index: 11, kind: input, shape index: {}]
  %s12 = inlined_call_operand.vmem [shape: bf16[2,64,32], index: 12, kind: input, shape index: {}]
  %s13 = inlined_call_operand.vmem [shape: f32[2,1,32], index: 13, kind: input, shape index: {}]
  %s14 = inlined_call_operand.vmem [shape: f32[2,1,32], index: 14, kind: input, shape index: {}]
  %s15 = inlined_call_operand.vmem [shape: f32[2,1,32], index: 15, kind: input, shape index: {}]
  %s16 = inlined_call_operand.vmem [shape: bf16[32,16], index: 16, kind: input, shape index: {}]
  %s17 = inlined_call_operand.vmem [shape: f32[1,16], index: 17, kind: input, shape index: {}]
  %s18 = inlined_call_operand.vmem [shape: bf16[16,16], index: 18, kind: input, shape index: {}]
  %s19 = inlined_call_operand.vmem [shape: f32[1,16], index: 19, kind: input, shape index: {}]
  %s20 = inlined_call_operand.vmem [shape: bf16[16,1], index: 20, kind: input, shape index: {}]
  %s21 = inlined_call_operand.<no memory space> [shape: f32[1,1], index: 21, kind: input, shape index: {}]
  %s22 = inlined_call_operand.vmem [shape: f32[2,1], index: 22, kind: output, shape index: {}]
  %s23 = sld [smem:[#allocation0]]
  $region129: #{_lambda_.1} parent=0
    _
  %s25 = ssub.s32 1, %s23
  %s26 = scalar_select 0, %s25, %s23
  %v27 = vstv %s21
  %28 = vst [vmem:[#allocation3] sm:$0x1] %v27
  loop: start=0, step=1, limit=4
  $region2: #{_lambda_.1} parent=0 // loop_pre_header
    _
  $region3: #{_lambda_.1} parent=0 // loop_header
    %s30 = sphi 0, %s34
    %p31 = scmp.ge.s32.totalorder %s30, 4
    %s38 = sphi 0, %s38
    %s40 = sphi 0, %s38
    %s41 = sphi 0, %s40
    %s55 = sphi 0, %s41
    %s59 = sphi 0, %s59
    %s61 = sphi 0, %s59
    %s62 = sphi 0, %s61
    %s76 = sphi 0, %s62
    %s80 = sphi 0, %s80
    %s82 = sphi 0, %s80
    %s83 = sphi 0, %s82
    %s97 = sphi 0, %s83
    %s101 = sphi 0, %s101
    %s103 = sphi 0, %s101
    %s104 = sphi 0, %s103
    %s118 = sphi 0, %s104
    %s124 = sphi 0, %s126
    %s127 = sphi 0, %s124
    %s128 = sphi 0, %s127
    %s144 = sphi 0, %s128
    %s150 = sphi 0, %s152
    %s153 = sphi 0, %s150
    %s154 = sphi 0, %s153
    %s170 = sphi 0, %s154
    %s176 = sphi 0, %s178
    %s179 = sphi 0, %s176
    %s180 = sphi 0, %s179
    %s196 = sphi 0, %s180
    %s202 = sphi 0, %s204
    %s205 = sphi 0, %s202
    %s206 = sphi 0, %s205
    %s222 = sphi 0, %s206
    %s228 = sphi 0, %s230
    %s231 = sphi 0, %s228
    %s232 = sphi 0, %s231
    %s248 = sphi 0, %s232
    %s254 = sphi 0, %s256
    %s257 = sphi 0, %s254
    %s258 = sphi 0, %s257
    %s274 = sphi 0, %s258
    %s280 = sphi 0, %s282
    %s283 = sphi 0, %s280
    %s284 = sphi 0, %s283
    %s300 = sphi 0, %s284
    %s306 = sphi 0, %s308
    %s309 = sphi 0, %s306
    %s310 = sphi 0, %s309
    %s326 = sphi 0, %s310
    %s332 = sphi 0, %s334
    %s335 = sphi 0, %s332
    %s336 = sphi 0, %s335
    %s352 = sphi 0, %s336
    %s358 = sphi 0, %s360
    %s361 = sphi 0, %s358
    %s362 = sphi 0, %s361
    %s378 = sphi 0, %s362
    %s384 = sphi 0, %s386
    %s387 = sphi 0, %s384
    %s388 = sphi 0, %s387
    %s404 = sphi 0, %s388
    %s410 = sphi 0, %s412
    %s413 = sphi 0, %s410
    %s414 = sphi 0, %s413
    %s430 = sphi 0, %s414
    %s434 = sphi 0, %s434
    %s436 = sphi 0, %s434
    %s437 = sphi 0, %s436
    %s451 = sphi 0, %s437
    %s455 = sphi 0, %s455
    %s457 = sphi 0, %s455
    %s458 = sphi 0, %s457
    %s472 = sphi 0, %s458
    %s476 = sphi 0, %s476
    %s478 = sphi 0, %s476
    %s479 = sphi 0, %s478
    %s493 = sphi 0, %s479
    %s497 = sphi 0, %s497
    %s499 = sphi 0, %s497
    %s500 = sphi 0, %s499
    %s514 = sphi 0, %s500
    %s518 = sphi 0, %s518
    %s520 = sphi 0, %s518
    %s521 = sphi 0, %s520
    %s535 = sphi 0, %s521
    %s539 = sphi 0, %s539
    %s541 = sphi 0, %s539
    %s542 = sphi 0, %s541
    %s556 = sphi 0, %s542
    %s560 = sphi 0, %s560
    %s562 = sphi 0, %s560
    %s563 = sphi 0, %s562
    %s577 = sphi 0, %s563
  $region4: #{_lambda_.1} parent=0 // loop_header_branch
    %33 = sbr.rel (%p31) target = $region8
  $region5: #{_lambda_.1} parent=0 // loop_body
    %s35 = ssub.s32 %s30, 1
    %s36 = ssub.s32 %s30, 2
    %s37 = sadd.s32 %s30, 1
    %s39 = sadd.s32 %s38, 1
    %p42 = scmp.eq.s32.totalorder %s30, 1
    %p43 = scmp.ne.s32.totalorder %s38, %s40
    %p44 = scmp.eq.s32.totalorder %s30, 0
    %p45 = por %p43, %p44
    %p46 = scmp.ne.s32.totalorder %s38, %s40
    %p47 = scmp.eq.s32.totalorder %s35, 1
    %p48 = por %p46, %p47
    %p49 = scmp.ne.s32.totalorder %s40, %s41
    %p50 = scmp.eq.s32.totalorder %s35, 0
    %p51 = por %p49, %p50
    %p52 = scmp.ne.s32.totalorder %s40, %s41
    %p53 = scmp.eq.s32.totalorder %s36, 1
    %p54 = por %p52, %p53
    %p56 = scmp.ne.s32.totalorder %s41, %s55
    %p57 = scmp.eq.s32.totalorder %s36, 0
    %p58 = por %p56, %p57
    %s60 = sadd.s32 %s59, 1
    %p63 = scmp.eq.s32.totalorder %s30, 1
    %p64 = scmp.ne.s32.totalorder %s59, %s61
    %p65 = scmp.eq.s32.totalorder %s30, 0
    %p66 = por %p64, %p65
    %p67 = scmp.ne.s32.totalorder %s59, %s61
    %p68 = scmp.eq.s32.totalorder %s35, 1
    %p69 = por %p67, %p68
    %p70 = scmp.ne.s32.totalorder %s61, %s62
    %p71 = scmp.eq.s32.totalorder %s35, 0
    %p72 = por %p70, %p71
    %p73 = scmp.ne.s32.totalorder %s61, %s62
    %p74 = scmp.eq.s32.totalorder %s36, 1
    %p75 = por %p73, %p74
    %p77 = scmp.ne.s32.totalorder %s62, %s76
    %p78 = scmp.eq.s32.totalorder %s36, 0
    %p79 = por %p77, %p78
    %s81 = sadd.s32 %s80, 1
    %p84 = scmp.eq.s32.totalorder %s30, 1
    %p85 = scmp.ne.s32.totalorder %s80, %s82
    %p86 = scmp.eq.s32.totalorder %s30, 0
    %p87 = por %p85, %p86
    %p88 = scmp.ne.s32.totalorder %s80, %s82
    %p89 = scmp.eq.s32.totalorder %s35, 1
    %p90 = por %p88, %p89
    %p91 = scmp.ne.s32.totalorder %s82, %s83
    %p92 = scmp.eq.s32.totalorder %s35, 0
    %p93 = por %p91, %p92
    %p94 = scmp.ne.s32.totalorder %s82, %s83
    %p95 = scmp.eq.s32.totalorder %s36, 1
    %p96 = por %p94, %p95
    %p98 = scmp.ne.s32.totalorder %s83, %s97
    %p99 = scmp.eq.s32.totalorder %s36, 0
    %p100 = por %p98, %p99
    %s102 = sadd.s32 %s101, 1
    %p105 = scmp.eq.s32.totalorder %s30, 1
    %p106 = scmp.ne.s32.totalorder %s101, %s103
    %p107 = scmp.eq.s32.totalorder %s30, 0
    %p108 = por %p106, %p107
    %p109 = scmp.ne.s32.totalorder %s101, %s103
    %p110 = scmp.eq.s32.totalorder %s35, 1
    %p111 = por %p109, %p110
    %p112 = scmp.ne.s32.totalorder %s103, %s104
    %p113 = scmp.eq.s32.totalorder %s35, 0
    %p114 = por %p112, %p113
    %p115 = scmp.ne.s32.totalorder %s103, %s104
    %p116 = scmp.eq.s32.totalorder %s36, 1
    %p117 = por %p115, %p116
    %p119 = scmp.ne.s32.totalorder %s104, %s118
    %p120 = scmp.eq.s32.totalorder %s36, 0
    %p121 = por %p119, %p120
    %s122 = ssub.s32 %s30, %s37
    %p123 = scmp.eq.s32.totalorder %s122, 0
    %s125 = sadd.s32 %s124, 1
    %s126 = scalar_select %p123, %s124, %s125
    %p129 = pneg %p123
    %p130 = scmp.eq.s32.totalorder %s30, 1
    %p131 = por %p129, %p130
    %p132 = scmp.ne.s32.totalorder %s124, %s127
    %p133 = scmp.eq.s32.totalorder %s30, 0
    %p134 = por %p132, %p133
    %p135 = scmp.ne.s32.totalorder %s124, %s127
    %p136 = scmp.eq.s32.totalorder %s35, 1
    %p137 = por %p135, %p136
    %p138 = scmp.ne.s32.totalorder %s127, %s128
    %p139 = scmp.eq.s32.totalorder %s35, 0
    %p140 = por %p138, %p139
    %p141 = scmp.ne.s32.totalorder %s127, %s128
    %p142 = scmp.eq.s32.totalorder %s36, 1
    %p143 = por %p141, %p142
    %p145 = scmp.ne.s32.totalorder %s128, %s144
    %p146 = scmp.eq.s32.totalorder %s36, 0
    %p147 = por %p145, %p146
    %s148 = ssub.s32 %s30, %s37
    %p149 = scmp.eq.s32.totalorder %s148, 0
    %s151 = sadd.s32 %s150, 1
    %s152 = scalar_select %p149, %s150, %s151
    %p155 = pneg %p149
    %p156 = scmp.eq.s32.totalorder %s30, 1
    %p157 = por %p155, %p156
    %p158 = scmp.ne.s32.totalorder %s150, %s153
    %p159 = scmp.eq.s32.totalorder %s30, 0
    %p160 = por %p158, %p159
    %p161 = scmp.ne.s32.totalorder %s150, %s153
    %p162 = scmp.eq.s32.totalorder %s35, 1
    %p163 = por %p161, %p162
    %p164 = scmp.ne.s32.totalorder %s153, %s154
    %p165 = scmp.eq.s32.totalorder %s35, 0
    %p166 = por %p164, %p165
    %p167 = scmp.ne.s32.totalorder %s153, %s154
    %p168 = scmp.eq.s32.totalorder %s36, 1
    %p169 = por %p167, %p168
    %p171 = scmp.ne.s32.totalorder %s154, %s170
    %p172 = scmp.eq.s32.totalorder %s36, 0
    %p173 = por %p171, %p172
    %s174 = ssub.s32 %s30, %s37
    %p175 = scmp.eq.s32.totalorder %s174, 0
    %s177 = sadd.s32 %s176, 1
    %s178 = scalar_select %p175, %s176, %s177
    %p181 = pneg %p175
    %p182 = scmp.eq.s32.totalorder %s30, 1
    %p183 = por %p181, %p182
    %p184 = scmp.ne.s32.totalorder %s176, %s179
    %p185 = scmp.eq.s32.totalorder %s30, 0
    %p186 = por %p184, %p185
    %p187 = scmp.ne.s32.totalorder %s176, %s179
    %p188 = scmp.eq.s32.totalorder %s35, 1
    %p189 = por %p187, %p188
    %p190 = scmp.ne.s32.totalorder %s179, %s180
    %p191 = scmp.eq.s32.totalorder %s35, 0
    %p192 = por %p190, %p191
    %p193 = scmp.ne.s32.totalorder %s179, %s180
    %p194 = scmp.eq.s32.totalorder %s36, 1
    %p195 = por %p193, %p194
    %p197 = scmp.ne.s32.totalorder %s180, %s196
    %p198 = scmp.eq.s32.totalorder %s36, 0
    %p199 = por %p197, %p198
    %s200 = ssub.s32 %s30, %s37
    %p201 = scmp.eq.s32.totalorder %s200, 0
    %s203 = sadd.s32 %s202, 1
    %s204 = scalar_select %p201, %s202, %s203
    %p207 = pneg %p201
    %p208 = scmp.eq.s32.totalorder %s30, 1
    %p209 = por %p207, %p208
    %p210 = scmp.ne.s32.totalorder %s202, %s205
    %p211 = scmp.eq.s32.totalorder %s30, 0
    %p212 = por %p210, %p211
    %p213 = scmp.ne.s32.totalorder %s202, %s205
    %p214 = scmp.eq.s32.totalorder %s35, 1
    %p215 = por %p213, %p214
    %p216 = scmp.ne.s32.totalorder %s205, %s206
    %p217 = scmp.eq.s32.totalorder %s35, 0
    %p218 = por %p216, %p217
    %p219 = scmp.ne.s32.totalorder %s205, %s206
    %p220 = scmp.eq.s32.totalorder %s36, 1
    %p221 = por %p219, %p220
    %p223 = scmp.ne.s32.totalorder %s206, %s222
    %p224 = scmp.eq.s32.totalorder %s36, 0
    %p225 = por %p223, %p224
    %s226 = ssub.s32 %s30, %s37
    %p227 = scmp.eq.s32.totalorder %s226, 0
    %s229 = sadd.s32 %s228, 1
    %s230 = scalar_select %p227, %s228, %s229
    %p233 = pneg %p227
    %p234 = scmp.eq.s32.totalorder %s30, 1
    %p235 = por %p233, %p234
    %p236 = scmp.ne.s32.totalorder %s228, %s231
    %p237 = scmp.eq.s32.totalorder %s30, 0
    %p238 = por %p236, %p237
    %p239 = scmp.ne.s32.totalorder %s228, %s231
    %p240 = scmp.eq.s32.totalorder %s35, 1
    %p241 = por %p239, %p240
    %p242 = scmp.ne.s32.totalorder %s231, %s232
    %p243 = scmp.eq.s32.totalorder %s35, 0
    %p244 = por %p242, %p243
    %p245 = scmp.ne.s32.totalorder %s231, %s232
    %p246 = scmp.eq.s32.totalorder %s36, 1
    %p247 = por %p245, %p246
    %p249 = scmp.ne.s32.totalorder %s232, %s248
    %p250 = scmp.eq.s32.totalorder %s36, 0
    %p251 = por %p249, %p250
    %s252 = ssub.s32 %s30, %s37
    %p253 = scmp.eq.s32.totalorder %s252, 0
    %s255 = sadd.s32 %s254, 1
    %s256 = scalar_select %p253, %s254, %s255
    %p259 = pneg %p253
    %p260 = scmp.eq.s32.totalorder %s30, 1
    %p261 = por %p259, %p260
    %p262 = scmp.ne.s32.totalorder %s254, %s257
    %p263 = scmp.eq.s32.totalorder %s30, 0
    %p264 = por %p262, %p263
    %p265 = scmp.ne.s32.totalorder %s254, %s257
    %p266 = scmp.eq.s32.totalorder %s35, 1
    %p267 = por %p265, %p266
    %p268 = scmp.ne.s32.totalorder %s257, %s258
    %p269 = scmp.eq.s32.totalorder %s35, 0
    %p270 = por %p268, %p269
    %p271 = scmp.ne.s32.totalorder %s257, %s258
    %p272 = scmp.eq.s32.totalorder %s36, 1
    %p273 = por %p271, %p272
    %p275 = scmp.ne.s32.totalorder %s258, %s274
    %p276 = scmp.eq.s32.totalorder %s36, 0
    %p277 = por %p275, %p276
    %s278 = ssub.s32 %s30, %s37
    %p279 = scmp.eq.s32.totalorder %s278, 0
    %s281 = sadd.s32 %s280, 1
    %s282 = scalar_select %p279, %s280, %s281
    %p285 = pneg %p279
    %p286 = scmp.eq.s32.totalorder %s30, 1
    %p287 = por %p285, %p286
    %p288 = scmp.ne.s32.totalorder %s280, %s283
    %p289 = scmp.eq.s32.totalorder %s30, 0
    %p290 = por %p288, %p289
    %p291 = scmp.ne.s32.totalorder %s280, %s283
    %p292 = scmp.eq.s32.totalorder %s35, 1
    %p293 = por %p291, %p292
    %p294 = scmp.ne.s32.totalorder %s283, %s284
    %p295 = scmp.eq.s32.totalorder %s35, 0
    %p296 = por %p294, %p295
    %p297 = scmp.ne.s32.totalorder %s283, %s284
    %p298 = scmp.eq.s32.totalorder %s36, 1
    %p299 = por %p297, %p298
    %p301 = scmp.ne.s32.totalorder %s284, %s300
    %p302 = scmp.eq.s32.totalorder %s36, 0
    %p303 = por %p301, %p302
    %s304 = ssub.s32 %s30, %s37
    %p305 = scmp.eq.s32.totalorder %s304, 0
    %s307 = sadd.s32 %s306, 1
    %s308 = scalar_select %p305, %s306, %s307
    %p311 = pneg %p305
    %p312 = scmp.eq.s32.totalorder %s30, 1
    %p313 = por %p311, %p312
    %p314 = scmp.ne.s32.totalorder %s306, %s309
    %p315 = scmp.eq.s32.totalorder %s30, 0
    %p316 = por %p314, %p315
    %p317 = scmp.ne.s32.totalorder %s306, %s309
    %p318 = scmp.eq.s32.totalorder %s35, 1
    %p319 = por %p317, %p318
    %p320 = scmp.ne.s32.totalorder %s309, %s310
    %p321 = scmp.eq.s32.totalorder %s35, 0
    %p322 = por %p320, %p321
    %p323 = scmp.ne.s32.totalorder %s309, %s310
    %p324 = scmp.eq.s32.totalorder %s36, 1
    %p325 = por %p323, %p324
    %p327 = scmp.ne.s32.totalorder %s310, %s326
    %p328 = scmp.eq.s32.totalorder %s36, 0
    %p329 = por %p327, %p328
    %s330 = ssub.s32 %s30, %s37
    %p331 = scmp.eq.s32.totalorder %s330, 0
    %s333 = sadd.s32 %s332, 1
    %s334 = scalar_select %p331, %s332, %s333
    %p337 = pneg %p331
    %p338 = scmp.eq.s32.totalorder %s30, 1
    %p339 = por %p337, %p338
    %p340 = scmp.ne.s32.totalorder %s332, %s335
    %p341 = scmp.eq.s32.totalorder %s30, 0
    %p342 = por %p340, %p341
    %p343 = scmp.ne.s32.totalorder %s332, %s335
    %p344 = scmp.eq.s32.totalorder %s35, 1
    %p345 = por %p343, %p344
    %p346 = scmp.ne.s32.totalorder %s335, %s336
    %p347 = scmp.eq.s32.totalorder %s35, 0
    %p348 = por %p346, %p347
    %p349 = scmp.ne.s32.totalorder %s335, %s336
    %p350 = scmp.eq.s32.totalorder %s36, 1
    %p351 = por %p349, %p350
    %p353 = scmp.ne.s32.totalorder %s336, %s352
    %p354 = scmp.eq.s32.totalorder %s36, 0
    %p355 = por %p353, %p354
    %s356 = ssub.s32 %s30, %s37
    %p357 = scmp.eq.s32.totalorder %s356, 0
    %s359 = sadd.s32 %s358, 1
    %s360 = scalar_select %p357, %s358, %s359
    %p363 = pneg %p357
    %p364 = scmp.eq.s32.totalorder %s30, 1
    %p365 = por %p363, %p364
    %p366 = scmp.ne.s32.totalorder %s358, %s361
    %p367 = scmp.eq.s32.totalorder %s30, 0
    %p368 = por %p366, %p367
    %p369 = scmp.ne.s32.totalorder %s358, %s361
    %p370 = scmp.eq.s32.totalorder %s35, 1
    %p371 = por %p369, %p370
    %p372 = scmp.ne.s32.totalorder %s361, %s362
    %p373 = scmp.eq.s32.totalorder %s35, 0
    %p374 = por %p372, %p373
    %p375 = scmp.ne.s32.totalorder %s361, %s362
    %p376 = scmp.eq.s32.totalorder %s36, 1
    %p377 = por %p375, %p376
    %p379 = scmp.ne.s32.totalorder %s362, %s378
    %p380 = scmp.eq.s32.totalorder %s36, 0
    %p381 = por %p379, %p380
    %s382 = ssub.s32 %s30, %s37
    %p383 = scmp.eq.s32.totalorder %s382, 0
    %s385 = sadd.s32 %s384, 1
    %s386 = scalar_select %p383, %s384, %s385
    %p389 = pneg %p383
    %p390 = scmp.eq.s32.totalorder %s30, 1
    %p391 = por %p389, %p390
    %p392 = scmp.ne.s32.totalorder %s384, %s387
    %p393 = scmp.eq.s32.totalorder %s30, 0
    %p394 = por %p392, %p393
    %p395 = scmp.ne.s32.totalorder %s384, %s387
    %p396 = scmp.eq.s32.totalorder %s35, 1
    %p397 = por %p395, %p396
    %p398 = scmp.ne.s32.totalorder %s387, %s388
    %p399 = scmp.eq.s32.totalorder %s35, 0
    %p400 = por %p398, %p399
    %p401 = scmp.ne.s32.totalorder %s387, %s388
    %p402 = scmp.eq.s32.totalorder %s36, 1
    %p403 = por %p401, %p402
    %p405 = scmp.ne.s32.totalorder %s388, %s404
    %p406 = scmp.eq.s32.totalorder %s36, 0
    %p407 = por %p405, %p406
    %s408 = ssub.s32 %s30, %s37
    %p409 = scmp.eq.s32.totalorder %s408, 0
    %s411 = sadd.s32 %s410, 1
    %s412 = scalar_select %p409, %s410, %s411
    %p415 = pneg %p409
    %p416 = scmp.eq.s32.totalorder %s30, 1
    %p417 = por %p415, %p416
    %p418 = scmp.ne.s32.totalorder %s410, %s413
    %p419 = scmp.eq.s32.totalorder %s30, 0
    %p420 = por %p418, %p419
    %p421 = scmp.ne.s32.totalorder %s410, %s413
    %p422 = scmp.eq.s32.totalorder %s35, 1
    %p423 = por %p421, %p422
    %p424 = scmp.ne.s32.totalorder %s413, %s414
    %p425 = scmp.eq.s32.totalorder %s35, 0
    %p426 = por %p424, %p425
    %p427 = scmp.ne.s32.totalorder %s413, %s414
    %p428 = scmp.eq.s32.totalorder %s36, 1
    %p429 = por %p427, %p428
    %p431 = scmp.ne.s32.totalorder %s414, %s430
    %p432 = scmp.eq.s32.totalorder %s36, 0
    %p433 = por %p431, %p432
    %s435 = sadd.s32 %s434, 1
    %p438 = scmp.eq.s32.totalorder %s30, 1
    %p439 = scmp.ne.s32.totalorder %s434, %s436
    %p440 = scmp.eq.s32.totalorder %s30, 0
    %p441 = por %p439, %p440
    %p442 = scmp.ne.s32.totalorder %s434, %s436
    %p443 = scmp.eq.s32.totalorder %s35, 1
    %p444 = por %p442, %p443
    %p445 = scmp.ne.s32.totalorder %s436, %s437
    %p446 = scmp.eq.s32.totalorder %s35, 0
    %p447 = por %p445, %p446
    %p448 = scmp.ne.s32.totalorder %s436, %s437
    %p449 = scmp.eq.s32.totalorder %s36, 1
    %p450 = por %p448, %p449
    %p452 = scmp.ne.s32.totalorder %s437, %s451
    %p453 = scmp.eq.s32.totalorder %s36, 0
    %p454 = por %p452, %p453
    %s456 = sadd.s32 %s455, 1
    %p459 = scmp.eq.s32.totalorder %s30, 1
    %p460 = scmp.ne.s32.totalorder %s455, %s457
    %p461 = scmp.eq.s32.totalorder %s30, 0
    %p462 = por %p460, %p461
    %p463 = scmp.ne.s32.totalorder %s455, %s457
    %p464 = scmp.eq.s32.totalorder %s35, 1
    %p465 = por %p463, %p464
    %p466 = scmp.ne.s32.totalorder %s457, %s458
    %p467 = scmp.eq.s32.totalorder %s35, 0
    %p468 = por %p466, %p467
    %p469 = scmp.ne.s32.totalorder %s457, %s458
    %p470 = scmp.eq.s32.totalorder %s36, 1
    %p471 = por %p469, %p470
    %p473 = scmp.ne.s32.totalorder %s458, %s472
    %p474 = scmp.eq.s32.totalorder %s36, 0
    %p475 = por %p473, %p474
    %s477 = sadd.s32 %s476, 1
    %p480 = scmp.eq.s32.totalorder %s30, 1
    %p481 = scmp.ne.s32.totalorder %s476, %s478
    %p482 = scmp.eq.s32.totalorder %s30, 0
    %p483 = por %p481, %p482
    %p484 = scmp.ne.s32.totalorder %s476, %s478
    %p485 = scmp.eq.s32.totalorder %s35, 1
    %p486 = por %p484, %p485
    %p487 = scmp.ne.s32.totalorder %s478, %s479
    %p488 = scmp.eq.s32.totalorder %s35, 0
    %p489 = por %p487, %p488
    %p490 = scmp.ne.s32.totalorder %s478, %s479
    %p491 = scmp.eq.s32.totalorder %s36, 1
    %p492 = por %p490, %p491
    %p494 = scmp.ne.s32.totalorder %s479, %s493
    %p495 = scmp.eq.s32.totalorder %s36, 0
    %p496 = por %p494, %p495
    %s498 = sadd.s32 %s497, 1
    %p501 = scmp.eq.s32.totalorder %s30, 1
    %p502 = scmp.ne.s32.totalorder %s497, %s499
    %p503 = scmp.eq.s32.totalorder %s30, 0
    %p504 = por %p502, %p503
    %p505 = scmp.ne.s32.totalorder %s497, %s499
    %p506 = scmp.eq.s32.totalorder %s35, 1
    %p507 = por %p505, %p506
    %p508 = scmp.ne.s32.totalorder %s499, %s500
    %p509 = scmp.eq.s32.totalorder %s35, 0
    %p510 = por %p508, %p509
    %p511 = scmp.ne.s32.totalorder %s499, %s500
    %p512 = scmp.eq.s32.totalorder %s36, 1
    %p513 = por %p511, %p512
    %p515 = scmp.ne.s32.totalorder %s500, %s514
    %p516 = scmp.eq.s32.totalorder %s36, 0
    %p517 = por %p515, %p516
    %s519 = sadd.s32 %s518, 1
    %p522 = scmp.eq.s32.totalorder %s30, 1
    %p523 = scmp.ne.s32.totalorder %s518, %s520
    %p524 = scmp.eq.s32.totalorder %s30, 0
    %p525 = por %p523, %p524
    %p526 = scmp.ne.s32.totalorder %s518, %s520
    %p527 = scmp.eq.s32.totalorder %s35, 1
    %p528 = por %p526, %p527
    %p529 = scmp.ne.s32.totalorder %s520, %s521
    %p530 = scmp.eq.s32.totalorder %s35, 0
    %p531 = por %p529, %p530
    %p532 = scmp.ne.s32.totalorder %s520, %s521
    %p533 = scmp.eq.s32.totalorder %s36, 1
    %p534 = por %p532, %p533
    %p536 = scmp.ne.s32.totalorder %s521, %s535
    %p537 = scmp.eq.s32.totalorder %s36, 0
    %p538 = por %p536, %p537
    %s540 = sadd.s32 %s539, 1
    %p543 = scmp.eq.s32.totalorder %s30, 1
    %p544 = scmp.ne.s32.totalorder %s539, %s541
    %p545 = scmp.eq.s32.totalorder %s30, 0
    %p546 = por %p544, %p545
    %p547 = scmp.ne.s32.totalorder %s539, %s541
    %p548 = scmp.eq.s32.totalorder %s35, 1
    %p549 = por %p547, %p548
    %p550 = scmp.ne.s32.totalorder %s541, %s542
    %p551 = scmp.eq.s32.totalorder %s35, 0
    %p552 = por %p550, %p551
    %p553 = scmp.ne.s32.totalorder %s541, %s542
    %p554 = scmp.eq.s32.totalorder %s36, 1
    %p555 = por %p553, %p554
    %p557 = scmp.ne.s32.totalorder %s542, %s556
    %p558 = scmp.eq.s32.totalorder %s36, 0
    %p559 = por %p557, %p558
    %s561 = sadd.s32 %s560, 1
    %p564 = scmp.eq.s32.totalorder %s30, 1
    %p565 = scmp.ne.s32.totalorder %s560, %s562
    %p566 = scmp.eq.s32.totalorder %s30, 0
    %p567 = por %p565, %p566
    %p568 = scmp.ne.s32.totalorder %s560, %s562
    %p569 = scmp.eq.s32.totalorder %s35, 1
    %p570 = por %p568, %p569
    %p571 = scmp.ne.s32.totalorder %s562, %s563
    %p572 = scmp.eq.s32.totalorder %s35, 0
    %p573 = por %p571, %p572
    %p574 = scmp.ne.s32.totalorder %s562, %s563
    %p575 = scmp.eq.s32.totalorder %s36, 1
    %p576 = por %p574, %p575
    %p578 = scmp.ne.s32.totalorder %s563, %s577
    %p579 = scmp.eq.s32.totalorder %s36, 0
    %p580 = por %p578, %p579
    %p581 = scmp.le.s32.totalorder 1, %s30
    %p582 = scmp.lt.s32.totalorder %s30, 3
    %p583 = pnand %p581, %p582
    %p584 = pneg %p583
    // Predicated region
    $region9: #{_lambda_.1} parent=5 // pred_check
      _
    $region10: #{_lambda_.1} parent=5 // pred_check_branch
      %586 = sbr.rel (%p583) target = $region12
    $region11: #{_lambda_.1} parent=5 // pred_region
      %s587 = ssub.s32 %s30, 1
      // Predicated region
      $region13: #{_lambda_.1} parent=11 // pred_check
        %p588 = pneg %p51
      $region14: #{_lambda_.1} parent=11 // pred_check_branch
        %590 = sbr.rel (%p588) target = $region16
      $region15: #{_lambda_.1} parent=11 // pred_region
        _
      $region16: #{_lambda_.1} parent=11 // pred_fallthru
        _
      // Predicated region
      $region17: #{_lambda_.1} parent=11 // pred_check
        %p591 = pneg %p72
      $region18: #{_lambda_.1} parent=11 // pred_check_branch
        %593 = sbr.rel (%p591) target = $region20
      $region19: #{_lambda_.1} parent=11 // pred_region
        _
      $region20: #{_lambda_.1} parent=11 // pred_fallthru
        _
      // Predicated region
      $region21: #{_lambda_.1} parent=11 // pred_check
        %p594 = pneg %p93
      $region22: #{_lambda_.1} parent=11 // pred_check_branch
        %596 = sbr.rel (%p594) target = $region24
      $region23: #{_lambda_.1} parent=11 // pred_region
        _
      $region24: #{_lambda_.1} parent=11 // pred_fallthru
        _
      // Predicated region
      $region25: #{_lambda_.1} parent=11 // pred_check
        %p597 = pneg %p114
      $region26: #{_lambda_.1} parent=11 // pred_check_branch
        %599 = sbr.rel (%p597) target = $region28
      $region27: #{_lambda_.1} parent=11 // pred_region
        _
      $region28: #{_lambda_.1} parent=11 // pred_fallthru
        _
      // Predicated region
      $region29: #{_lambda_.1} parent=11 // pred_check
        %p600 = pneg %p447
      $region30: #{_lambda_.1} parent=11 // pred_check_branch
        %602 = sbr.rel (%p600) target = $region32
      $region31: #{_lambda_.1} parent=11 // pred_region
        _
      $region32: #{_lambda_.1} parent=11 // pred_fallthru
        _
      // Predicated region
      $region33: #{_lambda_.1} parent=11 // pred_check
        %p603 = pneg %p468
      $region34: #{_lambda_.1} parent=11 // pred_check_branch
        %605 = sbr.rel (%p603) target = $region36
      $region35: #{_lambda_.1} parent=11 // pred_region
        _
      $region36: #{_lambda_.1} parent=11 // pred_fallthru
        _
      // Predicated region
      $region37: #{_lambda_.1} parent=11 // pred_check
        %p606 = pneg %p489
      $region38: #{_lambda_.1} parent=11 // pred_check_branch
        %608 = sbr.rel (%p606) target = $region40
      $region39: #{_lambda_.1} parent=11 // pred_region
        _
      $region40: #{_lambda_.1} parent=11 // pred_fallthru
        _
      // Predicated region
      $region41: #{_lambda_.1} parent=11 // pred_check
        %p609 = pneg %p510
      $region42: #{_lambda_.1} parent=11 // pred_check_branch
        %611 = sbr.rel (%p609) target = $region44
      $region43: #{_lambda_.1} parent=11 // pred_region
        _
      $region44: #{_lambda_.1} parent=11 // pred_fallthru
        _
      // Predicated region
      $region45: #{_lambda_.1} parent=11 // pred_check
        %p612 = pneg %p531
      $region46: #{_lambda_.1} parent=11 // pred_check_branch
        %614 = sbr.rel (%p612) target = $region48
      $region47: #{_lambda_.1} parent=11 // pred_region
        _
      $region48: #{_lambda_.1} parent=11 // pred_fallthru
        _
      // Predicated region
      $region49: #{_lambda_.1} parent=11 // pred_check
        %p615 = pneg %p552
      $region50: #{_lambda_.1} parent=11 // pred_check_branch
        %617 = sbr.rel (%p615) target = $region52
      $region51: #{_lambda_.1} parent=11 // pred_region
        _
      $region52: #{_lambda_.1} parent=11 // pred_fallthru
        _
    $region12: #{_lambda_.1} parent=5 // pred_fallthru
      _
    %p618 = scmp.lt.s32.totalorder %s30, 2
    // Predicated region
    $region53: #{_lambda_.1} parent=5 // pred_check
      %p619 = pneg %p618
    $region54: #{_lambda_.1} parent=5 // pred_check_branch
      %621 = sbr.rel (%p619) target = $region56
    $region55: #{_lambda_.1} parent=5 // pred_region
      // Predicated region
      $region57: #{_lambda_.1} parent=55 // pred_check
        %p622 = pneg %p134
      $region58: #{_lambda_.1} parent=55 // pred_check_branch
        %624 = sbr.rel (%p622) target = $region60
      $region59: #{_lambda_.1} parent=55 // pred_region
        %p625 = scmp.lt.s32.totalorder %s30, 1
        %s626 = scalar_select %p625, %s30, 1
        %s627 = smul.addr %s626, 4
        %s628 = smul.addr %s627, 4
        %s629 = scalar_lea.vmem %s4, %s628
      $region60: #{_lambda_.1} parent=55 // pred_fallthru
        _
      // Predicated region
      $region61: #{_lambda_.1} parent=55 // pred_check
        %p630 = pneg %p160
      $region62: #{_lambda_.1} parent=55 // pred_check_branch
        %632 = sbr.rel (%p630) target = $region64
      $region63: #{_lambda_.1} parent=55 // pred_region
        %p633 = scmp.lt.s32.totalorder %s30, 1
        %s634 = scalar_select %p633, %s30, 1
        %s635 = scalar_lea.vmem %s5, %s634
      $region64: #{_lambda_.1} parent=55 // pred_fallthru
        _
      // Predicated region
      $region65: #{_lambda_.1} parent=55 // pred_check
        %p636 = pneg %p186
      $region66: #{_lambda_.1} parent=55 // pred_check_branch
        %638 = sbr.rel (%p636) target = $region68
      $region67: #{_lambda_.1} parent=55 // pred_region
        %p639 = scmp.lt.s32.totalorder %s30, 1
        %s640 = scalar_select %p639, %s30, 1
        %s641 = smul.addr %s640, 4
        %s642 = smul.addr %s641, 4
        %s643 = scalar_lea.vmem %s6, %s642
      $region68: #{_lambda_.1} parent=55 // pred_fallthru
        _
      // Predicated region
      $region69: #{_lambda_.1} parent=55 // pred_check
        %p644 = pneg %p212
      $region70: #{_lambda_.1} parent=55 // pred_check_branch
        %646 = sbr.rel (%p644) target = $region72
      $region71: #{_lambda_.1} parent=55 // pred_region
        %p647 = scmp.lt.s32.totalorder %s30, 1
        %s648 = scalar_select %p647, %s30, 1
        %s649 = scalar_lea.vmem %s7, %s648
      $region72: #{_lambda_.1} parent=55 // pred_fallthru
        _
      // Predicated region
      $region73: #{_lambda_.1} parent=55 // pred_check
        %p650 = pneg %p238
      $region74: #{_lambda_.1} parent=55 // pred_check_branch
        %652 = sbr.rel (%p650) target = $region76
      $region75: #{_lambda_.1} parent=55 // pred_region
        %p653 = scmp.lt.s32.totalorder %s30, 1
        %s654 = scalar_select %p653, %s30, 1
        %s655 = scalar_lea.vmem %s8, %s654
      $region76: #{_lambda_.1} parent=55 // pred_fallthru
        _
      // Predicated region
      $region77: #{_lambda_.1} parent=55 // pred_check
        %p656 = pneg %p264
      $region78: #{_lambda_.1} parent=55 // pred_check_branch
        %658 = sbr.rel (%p656) target = $region80
      $region79: #{_lambda_.1} parent=55 // pred_region
        %p659 = scmp.lt.s32.totalorder %s30, 1
        %s660 = scalar_select %p659, %s30, 1
        %s661 = scalar_lea.vmem %s9, %s660
      $region80: #{_lambda_.1} parent=55 // pred_fallthru
        _
      // Predicated region
      $region81: #{_lambda_.1} parent=55 // pred_check
        %p662 = pneg %p290
      $region82: #{_lambda_.1} parent=55 // pred_check_branch
        %664 = sbr.rel (%p662) target = $region84
      $region83: #{_lambda_.1} parent=55 // pred_region
        %p665 = scmp.lt.s32.totalorder %s30, 1
        %s666 = scalar_select %p665, %s30, 1
        %s667 = smul.addr %s666, 4
        %s668 = smul.addr %s667, 4
        %s669 = scalar_lea.vmem %s10, %s668
      $region84: #{_lambda_.1} parent=55 // pred_fallthru
        _
      // Predicated region
      $region85: #{_lambda_.1} parent=55 // pred_check
        %p670 = pneg %p316
      $region86: #{_lambda_.1} parent=55 // pred_check_branch
        %672 = sbr.rel (%p670) target = $region88
      $region87: #{_lambda_.1} parent=55 // pred_region
        %p673 = scmp.lt.s32.totalorder %s30, 1
        %s674 = scalar_select %p673, %s30, 1
        %s675 = scalar_lea.vmem %s11, %s674
      $region88: #{_lambda_.1} parent=55 // pred_fallthru
        _
      // Predicated region
      $region89: #{_lambda_.1} parent=55 // pred_check
        %p676 = pneg %p342
      $region90: #{_lambda_.1} parent=55 // pred_check_branch
        %678 = sbr.rel (%p676) target = $region92
      $region91: #{_lambda_.1} parent=55 // pred_region
        %p679 = scmp.lt.s32.totalorder %s30, 1
        %s680 = scalar_select %p679, %s30, 1
        %s681 = smul.addr %s680, 8
        %s682 = smul.addr %s681, 4
        %s683 = scalar_lea.vmem %s12, %s682
      $region92: #{_lambda_.1} parent=55 // pred_fallthru
        _
      // Predicated region
      $region93: #{_lambda_.1} parent=55 // pred_check
        %p684 = pneg %p368
      $region94: #{_lambda_.1} parent=55 // pred_check_branch
        %686 = sbr.rel (%p684) target = $region96
      $region95: #{_lambda_.1} parent=55 // pred_region
        %p687 = scmp.lt.s32.totalorder %s30, 1
        %s688 = scalar_select %p687, %s30, 1
        %s689 = scalar_lea.vmem %s13, %s688
      $region96: #{_lambda_.1} parent=55 // pred_fallthru
        _
      // Predicated region
      $region97: #{_lambda_.1} parent=55 // pred_check
        %p690 = pneg %p394
      $region98: #{_lambda_.1} parent=55 // pred_check_branch
        %692 = sbr.rel (%p690) target = $region100
      $region99: #{_lambda_.1} parent=55 // pred_region
        %p693 = scmp.lt.s32.totalorder %s30, 1
        %s694 = scalar_select %p693, %s30, 1
        %s695 = scalar_lea.vmem %s14, %s694
      $region100: #{_lambda_.1} parent=55 // pred_fallthru
        _
      // Predicated region
      $region101: #{_lambda_.1} parent=55 // pred_check
        %p696 = pneg %p420
      $region102: #{_lambda_.1} parent=55 // pred_check_branch
        %698 = sbr.rel (%p696) target = $region104
      $region103: #{_lambda_.1} parent=55 // pred_region
        %p699 = scmp.lt.s32.totalorder %s30, 1
        %s700 = scalar_select %p699, %s30, 1
        %s701 = scalar_lea.vmem %s15, %s700
      $region104: #{_lambda_.1} parent=55 // pred_fallthru
        _
    $region56: #{_lambda_.1} parent=5 // pred_fallthru
      _
    %p702 = scmp.le.s32.totalorder 1, %s30
    %p703 = scmp.lt.s32.totalorder %s30, 3
    %p704 = pnand %p702, %p703
    %p705 = pneg %p704
    // Predicated region
    $region105: #{_lambda_.1} parent=5 // pred_check
      _
    $region106: #{_lambda_.1} parent=5 // pred_check_branch
      %707 = sbr.rel (%p704) target = $region108
    $region107: #{_lambda_.1} parent=5 // pred_region
      %s708 = ssub.s32 %s30, 1
      %p709 = pneg %p51
      %p710 = pneg %p48
      %p711 = pneg %p72
      %p712 = pneg %p69
      %p713 = pneg %p93
      %p714 = pneg %p90
      %p715 = pneg %p114
      %p716 = pneg %p111
      %p717 = scmp.lt.s32.totalorder %s35, 1
      %s718 = scalar_select %p717, %s35, 1
      %s719 = smul.addr %s718, 4
      %s720 = smul.addr %s719, 4
      %s721 = scalar_lea.vmem %s4, %s720
      %p722 = pneg %p140
      %p723 = pneg %p137
      %p724 = scmp.lt.s32.totalorder %s35, 1
      %s725 = scalar_select %p724, %s35, 1
      %s726 = scalar_lea.vmem %s5, %s725
      %p727 = pneg %p166
      %p728 = pneg %p163
      %p729 = scmp.lt.s32.totalorder %s35, 1
      %s730 = scalar_select %p729, %s35, 1
      %s731 = smul.addr %s730, 4
      %s732 = smul.addr %s731, 4
      %s733 = scalar_lea.vmem %s6, %s732
      %p734 = pneg %p192
      %p735 = pneg %p189
      %p736 = scmp.lt.s32.totalorder %s35, 1
      %s737 = scalar_select %p736, %s35, 1
      %s738 = scalar_lea.vmem %s7, %s737
      %p739 = pneg %p218
      %p740 = pneg %p215
      %p741 = scmp.lt.s32.totalorder %s35, 1
      %s742 = scalar_select %p741, %s35, 1
      %s743 = scalar_lea.vmem %s8, %s742
      %p744 = pneg %p244
      %p745 = pneg %p241
      %p746 = scmp.lt.s32.totalorder %s35, 1
      %s747 = scalar_select %p746, %s35, 1
      %s748 = scalar_lea.vmem %s9, %s747
      %p749 = pneg %p270
      %p750 = pneg %p267
      %p751 = scmp.lt.s32.totalorder %s35, 1
      %s752 = scalar_select %p751, %s35, 1
      %s753 = smul.addr %s752, 4
      %s754 = smul.addr %s753, 4
      %s755 = scalar_lea.vmem %s10, %s754
      %p756 = pneg %p296
      %p757 = pneg %p293
      %p758 = scmp.lt.s32.totalorder %s35, 1
      %s759 = scalar_select %p758, %s35, 1
      %s760 = scalar_lea.vmem %s11, %s759
      %p761 = pneg %p322
      %p762 = pneg %p319
      %p763 = scmp.lt.s32.totalorder %s35, 1
      %s764 = scalar_select %p763, %s35, 1
      %s765 = smul.addr %s764, 8
      %s766 = smul.addr %s765, 4
      %s767 = scalar_lea.vmem %s12, %s766
      %p768 = pneg %p348
      %p769 = pneg %p345
      %p770 = scmp.lt.s32.totalorder %s35, 1
      %s771 = scalar_select %p770, %s35, 1
      %s772 = scalar_lea.vmem %s13, %s771
      %p773 = pneg %p374
      %p774 = pneg %p371
      %p775 = scmp.lt.s32.totalorder %s35, 1
      %s776 = scalar_select %p775, %s35, 1
      %s777 = scalar_lea.vmem %s14, %s776
      %p778 = pneg %p400
      %p779 = pneg %p397
      %p780 = scmp.lt.s32.totalorder %s35, 1
      %s781 = scalar_select %p780, %s35, 1
      %s782 = scalar_lea.vmem %s15, %s781
      %p783 = pneg %p426
      %p784 = pneg %p423
      %p785 = pneg %p447
      %p786 = pneg %p444
      %p787 = pneg %p468
      %p788 = pneg %p465
      %p789 = pneg %p489
      %p790 = pneg %p486
      %p791 = pneg %p510
      %p792 = pneg %p507
      %p793 = pneg %p531
      %p794 = pneg %p528
      %p795 = pneg %p552
      %p796 = pneg %p549
      %p797 = pneg %p573
      %p798 = pneg %p570
      %p799 = scmp.lt.s32.totalorder %s35, 1
      %s800 = scalar_select %p799, %s35, 1
      %s801 = smul.addr %s800, 4
      %s802 = smul.addr %s801, 4
      %s803 = scalar_lea.vmem %s4, %s802
      %p804 = scmp.lt.s32.totalorder %s35, 1
      %s805 = scalar_select %p804, %s35, 1
      %s806 = scalar_lea.vmem %s5, %s805
      %p807 = scmp.lt.s32.totalorder %s35, 1
      %s808 = scalar_select %p807, %s35, 1
      %s809 = smul.addr %s808, 4
      %s810 = smul.addr %s809, 4
      %s811 = scalar_lea.vmem %s6, %s810
      %p812 = scmp.lt.s32.totalorder %s35, 1
      %s813 = scalar_select %p812, %s35, 1
      %s814 = scalar_lea.vmem %s7, %s813
      %p815 = scmp.lt.s32.totalorder %s35, 1
      %s816 = scalar_select %p815, %s35, 1
      %s817 = scalar_lea.vmem %s8, %s816
      %p818 = scmp.lt.s32.totalorder %s35, 1
      %s819 = scalar_select %p818, %s35, 1
      %s820 = scalar_lea.vmem %s9, %s819
      %p821 = scmp.lt.s32.totalorder %s35, 1
      %s822 = scalar_select %p821, %s35, 1
      %s823 = smul.addr %s822, 4
      %s824 = smul.addr %s823, 4
      %s825 = scalar_lea.vmem %s10, %s824
      %p826 = scmp.lt.s32.totalorder %s35, 1
      %s827 = scalar_select %p826, %s35, 1
      %s828 = scalar_lea.vmem %s11, %s827
      %p829 = scmp.lt.s32.totalorder %s35, 1
      %s830 = scalar_select %p829, %s35, 1
      %s831 = smul.addr %s830, 8
      %s832 = smul.addr %s831, 4
      %s833 = scalar_lea.vmem %s12, %s832
      %p834 = scmp.lt.s32.totalorder %s35, 1
      %s835 = scalar_select %p834, %s35, 1
      %s836 = scalar_lea.vmem %s13, %s835
      %p837 = scmp.lt.s32.totalorder %s35, 1
      %s838 = scalar_select %p837, %s35, 1
      %s839 = scalar_lea.vmem %s14, %s838
      %p840 = scmp.lt.s32.totalorder %s35, 1
      %s841 = scalar_select %p840, %s35, 1
      %s842 = scalar_lea.vmem %s15, %s841
      %p844 = scmp.eq.s32.totalorder %s35, 0
      // Predicated region
      $region109: #{_lambda_.1} parent=107 // pred_check
        %p845 = pneg %p844
      $region110: #{_lambda_.1} parent=107 // pred_check_branch
        %847 = sbr.rel (%p845) target = $region112
      $region111: #{_lambda_.1} parent=107 // pred_region
        %v848 = vld [vmem:[%s0] sm:$0xf]
        %v849 = vld [vmem:[%s0 + $0x4] sm:$0xf]
        %v850 = vunpack.c.l.bf16 %v848
        %v851 = vunpack.c.l.bf16 %v849
        %v852 = vld [vmem:[%s2] sm:$0x1]
        %v853 = vld [vmem:[%s3] sm:$0x1]
        %vm854 = vcmask 261120
        %v855 = vsel %vm854, %v850, 0.0
        %856 = vadd.xlane.f32.xlu0 %v855
        %v857 = vpop.xlane.xlu0 %856
        %v858 = vsel %vm854, %v851, 0.0
        %859 = vadd.xlane.f32.xlu0 %v858
        %v860 = vpop.xlane.xlu0 %859
        %v861 = vrcp.pop 32.0
        %v862 = vmul.f32 %v857, %v861
        %v863 = vmul.f32 %v860, %v861
        %v864 = vsub.f32 %v850, %v862
        %v865 = vsub.f32 %v851, %v863
        %v866 = vmul.f32 %v864, %v864
        %v867 = vmul.f32 %v865, %v865
        %v868 = vsel %vm854, %v866, 0.0
        %869 = vadd.xlane.f32.xlu0 %v868
        %v870 = vpop.xlane.xlu0 %869
        %v871 = vsel %vm854, %v867, 0.0
        %872 = vadd.xlane.f32.xlu0 %v871
        %v873 = vpop.xlane.xlu0 %872
        %v874 = vmul.f32 %v870, %v861
        %v875 = vmul.f32 %v873, %v861
        %v876 = vadd.f32 %v874, 1e-12
        %v877 = vadd.f32 %v875, 1e-12
        %v878 = vrsqrt.pop %v876
        %v879 = vrsqrt.pop %v877
        %v880 = vmul.f32 %v864, %v878
        %v881 = vmul.f32 %v865, %v879
        %v883 = vlaneseq
        %v884 = vshrl.u32 %v883, 7
        %v885 = vsub.s32 0, %v884
        %v886 = vrot.slane %v852, %v885
        %v888 = vmul.f32 %v880, %v886
        %v889 = vmul.f32 %v881, %v886
        %v891 = vlaneseq
        %v892 = vshrl.u32 %v891, 7
        %v893 = vsub.s32 0, %v892
        %v894 = vrot.slane %v853, %v893
        %v896 = vadd.f32 %v888, %v894
        %v897 = vadd.f32 %v889, %v894
        %898 = vst.msk [vmem:[#allocation2] sm:$0xff] %vm854, %v896
        %899 = vst.msk [vmem:[#allocation2 + $0x8] sm:$0xff] %vm854, %v897
      $region112: #{_lambda_.1} parent=107 // pred_fallthru
        _
      %v900 = vld [vmem:[#allocation2] sm:$0xff]
      %v901 = vld [vmem:[#allocation2 + $0x8] sm:$0xff]
      %v902 = vpack.c.bf16 %v901, %v900
      %v903 = vld [vmem:[%s803] sm:$0xf]
      %v904 = vld [vmem:[%s803 + $0x4] sm:$0xf]
      %v905 = vld [vmem:[%s803 + $0x8] sm:$0xf]
      %v906 = vld [vmem:[%s803 + $0xc] sm:$0xf]
      %v907 = vld [vmem:[%s806] sm:$0x1]
      %v909 = vlaneseq
      %v910 = vshrl.u32 %v909, 7
      %v911 = vsub.s32 0, %v910
      %v912 = vrot.slane %v907, %v911
      %v918 = vunpack.c.l.b16 %v903
      %v919 = vunpack.c.l.b16 %v904
      %v920 = vunpack.c.l.b16 %v905
      %v921 = vunpack.c.l.b16 %v906
      %v922 = vpack.c.b16 %v919, %v918
      %v923 = vpack.c.b16 %v921, %v920
      %vm926 = vcmask 261120
      %v928 = vsel %vm926, %v902, 0
      %930 = vmatprep.subr.bf16.mxu0 0
      %931 = vmatpush1.bf16.msra.mxu0 %v922
      %932 = vmatprep.subr.bf16.mxu0 0
      %933 = vmatpush1.bf16.msra.mxu0 %v923
      %934 = vmatprep.subr.bf16.mxu0 0
      %935 = vmatpush1.bf16.msra.mxu0 0
      %936 = vmatprep.subr.bf16.mxu0 0
      %937 = vmatpush1.bf16.msra.mxu0 0
      %938 = vmatprep.subr.bf16.mxu0 0
      %939 = vmatpush1.bf16.msra.mxu0 0
      %940 = vmatprep.subr.bf16.mxu0 0
      %941 = vmatpush1.bf16.msra.mxu0 0
      %942 = vmatprep.subr.bf16.mxu0 0
      %943 = vmatpush1.bf16.msra.mxu0 0
      %944 = vmatprep.subr.bf16.mxu0 0
      %945 = vmatpush1.bf16.msra.mxu0 0
      %946 = vmatprep.subr.bf16.mxu0 0
      %947 = vmatpush1.bf16.msra.mxu0 0
      %948 = vmatprep.subr.bf16.mxu0 0
      %949 = vmatpush1.bf16.msra.mxu0 0
      %950 = vmatprep.subr.bf16.mxu0 0
      %951 = vmatpush1.bf16.msra.mxu0 0
      %952 = vmatprep.subr.bf16.mxu0 0
      %953 = vmatpush1.bf16.msra.mxu0 0
      %954 = vmatprep.subr.bf16.mxu0 0
      %955 = vmatpush1.bf16.msra.mxu0 0
      %956 = vmatprep.subr.bf16.mxu0 0
      %957 = vmatpush1.bf16.msra.mxu0 0
      %958 = vmatprep.subr.bf16.mxu0 0
      %959 = vmatpush1.bf16.msra.mxu0 0
      %960 = vmatprep.subr.bf16.mxu0 0
      %961 = vmatpush1.bf16.msra.mxu0 0
      %962 = vmatprep.mubr.bf16.mxu0 0
      %963 = vmatmul.mubr.bf16.gmra.mrb[0].mxu0 %v928
      %v964 = vpop.f32.mrb[0].mxu0
      %v965 = vadd.f32 %v912, %v964
      %v966 = vpop.f32.mrb[0].mxu0
      %v967 = vpop.f32.mrb[0].mxu0
      %v968 = vadd.f32 %v912, %v967
      %v969 = vpop.f32.mrb[0].mxu0
      %970 = vdwg.mxu0
      %973 = vrot.lane.b32.xlu0 %v965, 112
      %v974 = vpop.permute.xlu0 %973
      %975 = vrot.lane.b32.xlu0 %v968, 112
      %v976 = vpop.permute.xlu0 %975
      %v979 = vpack.c.bf16 %v965, %v965
      %v980 = vpack.c.bf16 %v968, %v968
      %v981 = vpack.c.bf16 %v974, %v974
      %v982 = vpack.c.bf16 %v976, %v976
      %v983 = vld [vmem:[%s1] sm:$0x3]
      %v984 = vsub.f32 1.0, %v983
      %v985 = vmul.f32 %v984, -10000.0
      %v987 = vrot.slane %v985, 6
      %vm989 = vcmask 1041408
      %v990 = vsel %vm989, %v985, %v987
      %v993 = vunpack.c.l.s4 1966171168
      %v994 = vunpack.c.0.s8 %v993
      %v995 = vlaneseq
      %v996 = vshrl.u32 %v995, 7
      %v997 = vsub.s32 %v994, %v996
      %v998 = vrot.slane %v990, %v997
      %v999 = vcombine.high %v998, %v998
      %v1001 = vunpack.c.l.s4 1966171168
      %v1002 = vunpack.c.0.s8 %v1001
      %v1003 = vlaneseq
      %v1004 = vshrl.u32 %v1003, 7
      %v1005 = vsub.s32 %v1002, %v1004
      %v1006 = vrot.slane %v998, %v1005
      %v1008 = vunpack.c.l.s4 1966171168
      %v1009 = vunpack.c.0.s8 %v1008
      %v1010 = vlaneseq
      %v1011 = vshrl.u32 %v1010, 7
      %v1012 = vsub.s32 %v1009, %v1011
      %v1013 = vrot.slane %v999, %v1012
      %v1014 = vcombine.high %v1006, %v1006
      %v1015 = vcombine.high %v1013, %v1013
      %v1016 = vlaneseq
      %v1017 = vshrl.u32 %v1016, 7
      %v1018 = vsub.s32 0, %v1017
      %v1019 = vrot.slane %v1006, %v1018
      %v1020 = vlaneseq
      %v1021 = vshrl.u32 %v1020, 7
      %v1022 = vsub.s32 0, %v1021
      %v1023 = vrot.slane %v1013, %v1022
      %v1024 = vlaneseq
      %v1025 = vshrl.u32 %v1024, 7
      %v1026 = vsub.s32 0, %v1025
      %v1027 = vrot.slane %v1014, %v1026
      %v1028 = vlaneseq
      %v1029 = vshrl.u32 %v1028, 7
      %v1030 = vsub.s32 0, %v1029
      %v1031 = vrot.slane %v1015, %v1030
      %1037 = vrot.lane.b32.xlu0 %v979, 96
      %v1038 = vpop.permute.xlu0 %1037
      %vm1039 = vcmask 130048
      %v1041 = vsel %vm1039, %v979, 0
      %v1044 = vsel %vm1039, %v1038, 0
      %1046 = vmatprep.subr.bf16.mxu0 0
      %1047 = vmatpush1.bf16.xpose.msra.mxu0 %v1044
      %1048 = vmatprep.subr.bf16.mxu0 0
      %1049 = vmatpush1.bf16.xpose.msra.mxu0 0
      %1050 = vmatprep.subr.bf16.mxu0 0
      %1051 = vmatpush1.bf16.xpose.msra.mxu0 0
      %1052 = vmatprep.subr.bf16.mxu0 0
      %1053 = vmatpush1.bf16.xpose.msra.mxu0 0
      %1054 = vmatprep.subr.bf16.mxu0 0
      %1055 = vmatpush1.bf16.xpose.msra.mxu0 0
      %1056 = vmatprep.subr.bf16.mxu0 0
      %1057 = vmatpush1.bf16.xpose.msra.mxu0 0
      %1058 = vmatprep.subr.bf16.mxu0 0
      %1059 = vmatpush1.bf16.xpose.msra.mxu0 0
      %1060 = vmatprep.subr.bf16.mxu0 0
      %1061 = vmatpush1.bf16.xpose.msra.mxu0 0
      %1062 = vmatprep.subr.bf16.mxu0 0
      %1063 = vmatpush1.bf16.xpose.msra.mxu0 0
      %1064 = vmatprep.subr.bf16.mxu0 0
      %1065 = vmatpush1.bf16.xpose.msra.mxu0 0
      %1066 = vmatprep.subr.bf16.mxu0 0
      %1067 = vmatpush1.bf16.xpose.msra.mxu0 0
      %1068 = vmatprep.subr.bf16.mxu0 0
      %1069 = vmatpush1.bf16.xpose.msra.mxu0 0
      %1070 = vmatprep.subr.bf16.mxu0 0
      %1071 = vmatpush1.bf16.xpose.msra.mxu0 0
      %1072 = vmatprep.subr.bf16.mxu0 0
      %1073 = vmatpush1.bf16.xpose.msra.mxu0 0
      %1074 = vmatprep.subr.bf16.mxu0 0
      %1075 = vmatpush1.bf16.xpose.msra.mxu0 0
      %1076 = vmatprep.subr.bf16.mxu0 0
      %1077 = vmatpush1.bf16.xpose.msra.mxu0 0
      %1078 = vmatprep.mubr.bf16.mxu0 0
      %1079 = vmatmul.mubr.bf16.gmra.mrb[0].mxu0 %v1041
      %v1080 = vpop.f32.mrb[0].mxu0
      %v1081 = vadd.f32 %v1019, %v1080
      %v1082 = vpop.f32.mrb[0].mxu0
      %v1083 = vpop.f32.mrb[0].mxu0
      %v1084 = vpop.f32.mrb[0].mxu0
      %1085 = vdwg.mxu0
      %1087 = vrot.lane.b32.xlu0 %v980, 96
      %v1088 = vpop.permute.xlu0 %1087
      %v1090 = vsel %vm1039, %v980, 0
      %v1093 = vsel %vm1039, %v1088, 0
      %1095 = vmatprep.subr.bf16.mxu0 0
      %1096 = vmatpush1.bf16.xpose.msra.mxu0 %v1093
      %1097 = vmatprep.subr.bf16.mxu0 0
      %1098 = vmatpush1.bf16.xpose.msra.mxu0 0
      %1099 = vmatprep.subr.bf16.mxu0 0
      %1100 = vmatpush1.bf16.xpose.msra.mxu0 0
      %1101 = vmatprep.subr.bf16.mxu0 0
      %1102 = vmatpush1.bf16.xpose.msra.mxu0 0
      %1103 = vmatprep.subr.bf16.mxu0 0
      %1104 = vmatpush1.bf16.xpose.msra.mxu0 0
      %1105 = vmatprep.subr.bf16.mxu0 0
      %1106 = vmatpush1.bf16.xpose.msra.mxu0 0
      %1107 = vmatprep.subr.bf16.mxu0 0
      %1108 = vmatpush1.bf16.xpose.msra.mxu0 0
      %1109 = vmatprep.subr.bf16.mxu0 0
      %1110 = vmatpush1.bf16.xpose.msra.mxu0 0
      %1111 = vmatprep.subr.bf16.mxu0 0
      %1112 = vmatpush1.bf16.xpose.msra.mxu0 0
      %1113 = vmatprep.subr.bf16.mxu0 0
      %1114 = vmatpush1.bf16.xpose.msra.mxu0 0
      %1115 = vmatprep.subr.bf16.mxu0 0
      %1116 = vmatpush1.bf16.xpose.msra.mxu0 0
      %1117 = vmatprep.subr.bf16.mxu0 0
      %1118 = vmatpush1.bf16.xpose.msra.mxu0 0
      %1119 = vmatprep.subr.bf16.mxu0 0
      %1120 = vmatpush1.bf16.xpose.msra.mxu0 0
      %1121 = vmatprep.subr.bf16.mxu0 0
      %1122 = vmatpush1.bf16.xpose.msra.mxu0 0
      %1123 = vmatprep.subr.bf16.mxu0 0
      %1124 = vmatpush1.bf16.xpose.msra.mxu0 0
      %1125 = vmatprep.subr.bf16.mxu0 0
      %1126 = vmatpush1.bf16.xpose.msra.mxu0 0
      %1127 = vmatprep.mubr.bf16.mxu0 0
      %1128 = vmatmul.mubr.bf16.gmra.mrb[0].mxu0 %v1090
      %v1129 = vpop.f32.mrb[0].mxu0
      %v1130 = vadd.f32 %v1023, %v1129
      %v1131 = vpop.f32.mrb[0].mxu0
      %v1132 = vpop.f32.mrb[0].mxu0
      %v1133 = vpop.f32.mrb[0].mxu0
      %1134 = vdwg.mxu0
      %1136 = vrot.lane.b32.xlu0 %v981, 96
      %v1137 = vpop.permute.xlu0 %1136
      %v1139 = vsel %vm1039, %v981, 0
      %v1142 = vsel %vm1039, %v1137, 0
      %1144 = vmatprep.subr.bf16.mxu0 0
      %1145 = vmatpush1.bf16.xpose.msra.mxu0 %v1142
      %1146 = vmatprep.subr.bf16.mxu0 0
      %1147 = vmatpush1.bf16.xpose.msra.mxu0 0
      %1148 = vmatprep.subr.bf16.mxu0 0
      %1149 = vmatpush1.bf16.xpose.msra.mxu0 0
      %1150 = vmatprep.subr.bf16.mxu0 0
      %1151 = vmatpush1.bf16.xpose.msra.mxu0 0
      %1152 = vmatprep.subr.bf16.mxu0 0
      %1153 = vmatpush1.bf16.xpose.msra.mxu0 0
      %1154 = vmatprep.subr.bf16.mxu0 0
      %1155 = vmatpush1.bf16.xpose.msra.mxu0 0
      %1156 = vmatprep.subr.bf16.mxu0 0
      %1157 = vmatpush1.bf16.xpose.msra.mxu0 0
      %1158 = vmatprep.subr.bf16.mxu0 0
      %1159 = vmatpush1.bf16.xpose.msra.mxu0 0
      %1160 = vmatprep.subr.bf16.mxu0 0
      %1161 = vmatpush1.bf16.xpose.msra.mxu0 0
      %1162 = vmatprep.subr.bf16.mxu0 0
      %1163 = vmatpush1.bf16.xpose.msra.mxu0 0
      %1164 = vmatprep.subr.bf16.mxu0 0
      %1165 = vmatpush1.bf16.xpose.msra.mxu0 0
      %1166 = vmatprep.subr.bf16.mxu0 0
      %1167 = vmatpush1.bf16.xpose.msra.mxu0 0
      %1168 = vmatprep.subr.bf16.mxu0 0
      %1169 = vmatpush1.bf16.xpose.msra.mxu0 0
      %1170 = vmatprep.subr.bf16.mxu0 0
      %1171 = vmatpush1.bf16.xpose.msra.mxu0 0
      %1172 = vmatprep.subr.bf16.mxu0 0
      %1173 = vmatpush1.bf16.xpose.msra.mxu0 0
      %1174 = vmatprep.subr.bf16.mxu0 0
      %1175 = vmatpush1.bf16.xpose.msra.mxu0 0
      %1176 = vmatprep.mubr.bf16.mxu0 0
      %1177 = vmatmul.mubr.bf16.gmra.mrb[0].mxu0 %v1139
      %v1178 = vpop.f32.mrb[0].mxu0
      %v1179 = vadd.f32 %v1027, %v1178
      %v1180 = vpop.f32.mrb[0].mxu0
      %v1181 = vpop.f32.mrb[0].mxu0
      %v1182 = vpop.f32.mrb[0].mxu0
      %1183 = vdwg.mxu0
      %1185 = vrot.lane.b32.xlu0 %v982, 96
      %v1186 = vpop.permute.xlu0 %1185
      %v1188 = vsel %vm1039, %v982, 0
      %v1191 = vsel %vm1039, %v1186, 0
      %1193 = vmatprep.subr.bf16.mxu0 0
      %1194 = vmatpush1.bf16.xpose.msra.mxu0 %v1191
      %1195 = vmatprep.subr.bf16.mxu0 0
      %1196 = vmatpush1.bf16.xpose.msra.mxu0 0
      %1197 = vmatprep.subr.bf16.mxu0 0
      %1198 = vmatpush1.bf16.xpose.msra.mxu0 0
      %1199 = vmatprep.subr.bf16.mxu0 0
      %1200 = vmatpush1.bf16.xpose.msra.mxu0 0
      %1201 = vmatprep.subr.bf16.mxu0 0
      %1202 = vmatpush1.bf16.xpose.msra.mxu0 0
      %1203 = vmatprep.subr.bf16.mxu0 0
      %1204 = vmatpush1.bf16.xpose.msra.mxu0 0
      %1205 = vmatprep.subr.bf16.mxu0 0
      %1206 = vmatpush1.bf16.xpose.msra.mxu0 0
      %1207 = vmatprep.subr.bf16.mxu0 0
      %1208 = vmatpush1.bf16.xpose.msra.mxu0 0
      %1209 = vmatprep.subr.bf16.mxu0 0
      %1210 = vmatpush1.bf16.xpose.msra.mxu0 0
      %1211 = vmatprep.subr.bf16.mxu0 0
      %1212 = vmatpush1.bf16.xpose.msra.mxu0 0
      %1213 = vmatprep.subr.bf16.mxu0 0
      %1214 = vmatpush1.bf16.xpose.msra.mxu0 0
      %1215 = vmatprep.subr.bf16.mxu0 0
      %1216 = vmatpush1.bf16.xpose.msra.mxu0 0
      %1217 = vmatprep.subr.bf16.mxu0 0
      %1218 = vmatpush1.bf16.xpose.msra.mxu0 0
      %1219 = vmatprep.subr.bf16.mxu0 0
      %1220 = vmatpush1.bf16.xpose.msra.mxu0 0
      %1221 = vmatprep.subr.bf16.mxu0 0
      %1222 = vmatpush1.bf16.xpose.msra.mxu0 0
      %1223 = vmatprep.subr.bf16.mxu0 0
      %1224 = vmatpush1.bf16.xpose.msra.mxu0 0
      %1225 = vmatprep.mubr.bf16.mxu0 0
      %1226 = vmatmul.mubr.bf16.gmra.mrb[0].mxu0 %v1188
      %v1227 = vpop.f32.mrb[0].mxu0
      %v1228 = vadd.f32 %v1031, %v1227
      %v1229 = vpop.f32.mrb[0].mxu0
      %v1230 = vpop.f32.mrb[0].mxu0
      %v1231 = vpop.f32.mrb[0].mxu0
      %1232 = vdwg.mxu0
      %vm1233 = vcmask 64512
      %v1234 = vsel %vm1233, %v1081, -inf
      %1235 = vmax.xlane.f32.xlu0 %v1234
      %v1236 = vpop.xlane.xlu0 %1235
      %v1237 = vsel %vm1233, %v1130, -inf
      %1238 = vmax.xlane.f32.xlu0 %v1237
      %v1239 = vpop.xlane.xlu0 %1238
      %v1240 = vsel %vm1233, %v1179, -inf
      %1241 = vmax.xlane.f32.xlu0 %v1240
      %v1242 = vpop.xlane.xlu0 %1241
      %v1243 = vsel %vm1233, %v1228, -inf
      %1244 = vmax.xlane.f32.xlu0 %v1243
      %v1245 = vpop.xlane.xlu0 %1244
      %v1246 = vsub.f32 %v1081, %v1236
      %v1247 = vsub.f32 %v1130, %v1239
      %v1248 = vsub.f32 %v1179, %v1242
      %v1249 = vsub.f32 %v1228, %v1245
      %v1250 = vmul.f32 %v1246, 1.442695
      %v1251 = vpow.pop %v1250
      %v1252 = vmul.f32 %v1247, 1.442695
      %v1253 = vpow.pop %v1252
      %v1254 = vmul.f32 %v1248, 1.442695
      %v1255 = vpow.pop %v1254
      %v1256 = vmul.f32 %v1249, 1.442695
      %v1257 = vpow.pop %v1256
      %v1258 = vsel %vm1233, %v1251, 0.0
      %1259 = vadd.xlane.f32.xlu0 %v1258
      %v1260 = vpop.xlane.xlu0 %1259
      %v1261 = vsel %vm1233, %v1253, 0.0
      %1262 = vadd.xlane.f32.xlu0 %v1261
      %v1263 = vpop.xlane.xlu0 %1262
      %v1264 = vsel %vm1233, %v1255, 0.0
      %1265 = vadd.xlane.f32.xlu0 %v1264
      %v1266 = vpop.xlane.xlu0 %1265
      %v1267 = vsel %vm1233, %v1257, 0.0
      %1268 = vadd.xlane.f32.xlu0 %v1267
      %v1269 = vpop.xlane.xlu0 %1268
      %v1270 = vrcp.pop %v1260
      %v1271 = vrcp.pop %v1263
      %v1272 = vrcp.pop %v1266
      %v1273 = vrcp.pop %v1269
      %v1274 = vmul.f32 %v1251, %v1270
      %v1275 = vmul.f32 %v1253, %v1271
      %v1276 = vmul.f32 %v1255, %v1272
      %v1277 = vmul.f32 %v1257, %v1273
      %v1278 = vpack.c.bf16 %v1274, %v1274
      %v1279 = vpack.c.bf16 %v1275, %v1275
      %v1280 = vpack.c.bf16 %v1276, %v1276
      %v1281 = vpack.c.bf16 %v1277, %v1277
      %1282 = vrot.lane.b32.xlu0 %v979, 64
      %v1283 = vpop.permute.xlu0 %1282
      %v1285 = vsel %vm1233, %v1278, 0
      %vm1287 = vcmask 1043456
      %v1289 = vsel %vm1287, %v1283, 0
      %1291 = vmatprep.subr.bf16.mxu0 0
      %1292 = vmatpush1.bf16.msra.mxu0 %v1289
      %1293 = vmatprep.subr.bf16.mxu0 0
      %1294 = vmatpush1.bf16.msra.mxu0 0
      %1295 = vmatprep.subr.bf16.mxu0 0
      %1296 = vmatpush1.bf16.msra.mxu0 0
      %1297 = vmatprep.subr.bf16.mxu0 0
      %1298 = vmatpush1.bf16.msra.mxu0 0
      %1299 = vmatprep.subr.bf16.mxu0 0
      %1300 = vmatpush1.bf16.msra.mxu0 0
      %1301 = vmatprep.subr.bf16.mxu0 0
      %1302 = vmatpush1.bf16.msra.mxu0 0
      %1303 = vmatprep.subr.bf16.mxu0 0
      %1304 = vmatpush1.bf16.msra.mxu0 0
      %1305 = vmatprep.subr.bf16.mxu0 0
      %1306 = vmatpush1.bf16.msra.mxu0 0
      %1307 = vmatprep.subr.bf16.mxu0 0
      %1308 = vmatpush1.bf16.msra.mxu0 0
      %1309 = vmatprep.subr.bf16.mxu0 0
      %1310 = vmatpush1.bf16.msra.mxu0 0
      %1311 = vmatprep.subr.bf16.mxu0 0
      %1312 = vmatpush1.bf16.msra.mxu0 0
      %1313 = vmatprep.subr.bf16.mxu0 0
      %1314 = vmatpush1.bf16.msra.mxu0 0
      %1315 = vmatprep.subr.bf16.mxu0 0
      %1316 = vmatpush1.bf16.msra.mxu0 0
      %1317 = vmatprep.subr.bf16.mxu0 0
      %1318 = vmatpush1.bf16.msra.mxu0 0
      %1319 = vmatprep.subr.bf16.mxu0 0
      %1320 = vmatpush1.bf16.msra.mxu0 0
      %1321 = vmatprep.subr.bf16.mxu0 0
      %1322 = vmatpush1.bf16.msra.mxu0 0
      %1323 = vmatprep.mubr.bf16.mxu0 0
      %1324 = vmatmul.mubr.bf16.gmra.mrb[0].mxu0 %v1285
      %v1325 = vpop.f32.mrb[0].mxu0
      %v1326 = vadd.f32 0.0, %v1325
      %v1327 = vpop.f32.mrb[0].mxu0
      %v1328 = vpop.f32.mrb[0].mxu0
      %v1329 = vpop.f32.mrb[0].mxu0
      %1330 = vdwg.mxu0
      %1331 = vrot.lane.b32.xlu0 %v980, 64
      %v1332 = vpop.permute.xlu0 %1331
      %v1334 = vsel %vm1233, %v1279, 0
      %v1337 = vsel %vm1287, %v1332, 0
      %1339 = vmatprep.subr.bf16.mxu0 0
      %1340 = vmatpush1.bf16.msra.mxu0 %v1337
      %1341 = vmatprep.subr.bf16.mxu0 0
      %1342 = vmatpush1.bf16.msra.mxu0 0
      %1343 = vmatprep.subr.bf16.mxu0 0
      %1344 = vmatpush1.bf16.msra.mxu0 0
      %1345 = vmatprep.subr.bf16.mxu0 0
      %1346 = vmatpush1.bf16.msra.mxu0 0
      %1347 = vmatprep.subr.bf16.mxu0 0
      %1348 = vmatpush1.bf16.msra.mxu0 0
      %1349 = vmatprep.subr.bf16.mxu0 0
      %1350 = vmatpush1.bf16.msra.mxu0 0
      %1351 = vmatprep.subr.bf16.mxu0 0
      %1352 = vmatpush1.bf16.msra.mxu0 0
      %1353 = vmatprep.subr.bf16.mxu0 0
      %1354 = vmatpush1.bf16.msra.mxu0 0
      %1355 = vmatprep.subr.bf16.mxu0 0
      %1356 = vmatpush1.bf16.msra.mxu0 0
      %1357 = vmatprep.subr.bf16.mxu0 0
      %1358 = vmatpush1.bf16.msra.mxu0 0
      %1359 = vmatprep.subr.bf16.mxu0 0
      %1360 = vmatpush1.bf16.msra.mxu0 0
      %1361 = vmatprep.subr.bf16.mxu0 0
      %1362 = vmatpush1.bf16.msra.mxu0 0
      %1363 = vmatprep.subr.bf16.mxu0 0
      %1364 = vmatpush1.bf16.msra.mxu0 0
      %1365 = vmatprep.subr.bf16.mxu0 0
      %1366 = vmatpush1.bf16.msra.mxu0 0
      %1367 = vmatprep.subr.bf16.mxu0 0
      %1368 = vmatpush1.bf16.msra.mxu0 0
      %1369 = vmatprep.subr.bf16.mxu0 0
      %1370 = vmatpush1.bf16.msra.mxu0 0
      %1371 = vmatprep.mubr.bf16.mxu0 0
      %1372 = vmatmul.mubr.bf16.gmra.mrb[0].mxu0 %v1334
      %v1373 = vpop.f32.mrb[0].mxu0
      %v1374 = vadd.f32 0.0, %v1373
      %v1375 = vpop.f32.mrb[0].mxu0
      %v1376 = vpop.f32.mrb[0].mxu0
      %v1377 = vpop.f32.mrb[0].mxu0
      %1378 = vdwg.mxu0
      %1379 = vrot.lane.b32.xlu0 %v981, 64
      %v1380 = vpop.permute.xlu0 %1379
      %v1382 = vsel %vm1233, %v1280, 0
      %v1385 = vsel %vm1287, %v1380, 0
      %1387 = vmatprep.subr.bf16.mxu0 0
      %1388 = vmatpush1.bf16.msra.mxu0 %v1385
      %1389 = vmatprep.subr.bf16.mxu0 0
      %1390 = vmatpush1.bf16.msra.mxu0 0
      %1391 = vmatprep.subr.bf16.mxu0 0
      %1392 = vmatpush1.bf16.msra.mxu0 0
      %1393 = vmatprep.subr.bf16.mxu0 0
      %1394 = vmatpush1.bf16.msra.mxu0 0
      %1395 = vmatprep.subr.bf16.mxu0 0
      %1396 = vmatpush1.bf16.msra.mxu0 0
      %1397 = vmatprep.subr.bf16.mxu0 0
      %1398 = vmatpush1.bf16.msra.mxu0 0
      %1399 = vmatprep.subr.bf16.mxu0 0
      %1400 = vmatpush1.bf16.msra.mxu0 0
      %1401 = vmatprep.subr.bf16.mxu0 0
      %1402 = vmatpush1.bf16.msra.mxu0 0
      %1403 = vmatprep.subr.bf16.mxu0 0
      %1404 = vmatpush1.bf16.msra.mxu0 0
      %1405 = vmatprep.subr.bf16.mxu0 0
      %1406 = vmatpush1.bf16.msra.mxu0 0
      %1407 = vmatprep.subr.bf16.mxu0 0
      %1408 = vmatpush1.bf16.msra.mxu0 0
      %1409 = vmatprep.subr.bf16.mxu0 0
      %1410 = vmatpush1.bf16.msra.mxu0 0
      %1411 = vmatprep.subr.bf16.mxu0 0
      %1412 = vmatpush1.bf16.msra.mxu0 0
      %1413 = vmatprep.subr.bf16.mxu0 0
      %1414 = vmatpush1.bf16.msra.mxu0 0
      %1415 = vmatprep.subr.bf16.mxu0 0
      %1416 = vmatpush1.bf16.msra.mxu0 0
      %1417 = vmatprep.subr.bf16.mxu0 0
      %1418 = vmatpush1.bf16.msra.mxu0 0
      %1419 = vmatprep.mubr.bf16.mxu0 0
      %1420 = vmatmul.mubr.bf16.gmra.mrb[0].mxu0 %v1382
      %v1421 = vpop.f32.mrb[0].mxu0
      %v1422 = vadd.f32 0.0, %v1421
      %v1423 = vpop.f32.mrb[0].mxu0
      %v1424 = vpop.f32.mrb[0].mxu0
      %v1425 = vpop.f32.mrb[0].mxu0
      %1426 = vdwg.mxu0
      %1427 = vrot.lane.b32.xlu0 %v982, 64
      %v1428 = vpop.permute.xlu0 %1427
      %v1430 = vsel %vm1233, %v1281, 0
      %v1433 = vsel %vm1287, %v1428, 0
      %1435 = vmatprep.subr.bf16.mxu0 0
      %1436 = vmatpush1.bf16.msra.mxu0 %v1433
      %1437 = vmatprep.subr.bf16.mxu0 0
      %1438 = vmatpush1.bf16.msra.mxu0 0
      %1439 = vmatprep.subr.bf16.mxu0 0
      %1440 = vmatpush1.bf16.msra.mxu0 0
      %1441 = vmatprep.subr.bf16.mxu0 0
      %1442 = vmatpush1.bf16.msra.mxu0 0
      %1443 = vmatprep.subr.bf16.mxu0 0
      %1444 = vmatpush1.bf16.msra.mxu0 0
      %1445 = vmatprep.subr.bf16.mxu0 0
      %1446 = vmatpush1.bf16.msra.mxu0 0
      %1447 = vmatprep.subr.bf16.mxu0 0
      %1448 = vmatpush1.bf16.msra.mxu0 0
      %1449 = vmatprep.subr.bf16.mxu0 0
      %1450 = vmatpush1.bf16.msra.mxu0 0
      %1451 = vmatprep.subr.bf16.mxu0 0
      %1452 = vmatpush1.bf16.msra.mxu0 0
      %1453 = vmatprep.subr.bf16.mxu0 0
      %1454 = vmatpush1.bf16.msra.mxu0 0
      %1455 = vmatprep.subr.bf16.mxu0 0
      %1456 = vmatpush1.bf16.msra.mxu0 0
      %1457 = vmatprep.subr.bf16.mxu0 0
      %1458 = vmatpush1.bf16.msra.mxu0 0
      %1459 = vmatprep.subr.bf16.mxu0 0
      %1460 = vmatpush1.bf16.msra.mxu0 0
      %1461 = vmatprep.subr.bf16.mxu0 0
      %1462 = vmatpush1.bf16.msra.mxu0 0
      %1463 = vmatprep.subr.bf16.mxu0 0
      %1464 = vmatpush1.bf16.msra.mxu0 0
      %1465 = vmatprep.subr.bf16.mxu0 0
      %1466 = vmatpush1.bf16.msra.mxu0 0
      %1467 = vmatprep.mubr.bf16.mxu0 0
      %1468 = vmatmul.mubr.bf16.gmra.mrb[0].mxu0 %v1430
      %v1469 = vpop.f32.mrb[0].mxu0
      %v1470 = vadd.f32 0.0, %v1469
      %v1471 = vpop.f32.mrb[0].mxu0
      %v1472 = vpop.f32.mrb[0].mxu0
      %v1473 = vpop.f32.mrb[0].mxu0
      %1474 = vdwg.mxu0
      %1477 = vrot.lane.b32.xlu0 %v1422, 16
      %v1478 = vpop.permute.xlu0 %1477
      %1479 = vrot.lane.b32.xlu0 %v1470, 16
      %v1480 = vpop.permute.xlu0 %1479
      %v1483 = vsel %vm1039, %v1326, %v1478
      %v1484 = vsel %vm1039, %v1374, %v1480
      %v1485 = vpack.c.bf16 %v1484, %v1483
      %v1486 = vld [vmem:[%s811] sm:$0xf]
      %v1487 = vld [vmem:[%s811 + $0x4] sm:$0xf]
      %v1488 = vld [vmem:[%s811 + $0x8] sm:$0xf]
      %v1489 = vld [vmem:[%s811 + $0xc] sm:$0xf]
      %v1490 = vld [vmem:[%s814] sm:$0x1]
      %v1492 = vlaneseq
      %v1493 = vshrl.u32 %v1492, 7
      %v1494 = vsub.s32 0, %v1493
      %v1495 = vrot.slane %v1490, %v1494
      %v1501 = vunpack.c.l.b16 %v1486
      %v1502 = vunpack.c.l.b16 %v1487
      %v1503 = vunpack.c.l.b16 %v1488
      %v1504 = vunpack.c.l.b16 %v1489
      %v1505 = vpack.c.b16 %v1502, %v1501
      %v1506 = vpack.c.b16 %v1504, %v1503
      %v1510 = vsel %vm926, %v1485, 0
      %1512 = vmatprep.subr.bf16.mxu0 0
      %1513 = vmatpush1.bf16.msra.mxu0 %v1505
      %1514 = vmatprep.subr.bf16.mxu0 0
      %1515 = vmatpush1.bf16.msra.mxu0 %v1506
      %1516 = vmatprep.subr.bf16.mxu0 0
      %1517 = vmatpush1.bf16.msra.mxu0 0
      %1518 = vmatprep.subr.bf16.mxu0 0
      %1519 = vmatpush1.bf16.msra.mxu0 0
      %1520 = vmatprep.subr.bf16.mxu0 0
      %1521 = vmatpush1.bf16.msra.mxu0 0
      %1522 = vmatprep.subr.bf16.mxu0 0
      %1523 = vmatpush1.bf16.msra.mxu0 0
      %1524 = vmatprep.subr.bf16.mxu0 0
      %1525 = vmatpush1.bf16.msra.mxu0 0
      %1526 = vmatprep.subr.bf16.mxu0 0
      %1527 = vmatpush1.bf16.msra.mxu0 0
      %1528 = vmatprep.subr.bf16.mxu0 0
      %1529 = vmatpush1.bf16.msra.mxu0 0
      %1530 = vmatprep.subr.bf16.mxu0 0
      %1531 = vmatpush1.bf16.msra.mxu0 0
      %1532 = vmatprep.subr.bf16.mxu0 0
      %1533 = vmatpush1.bf16.msra.mxu0 0
      %1534 = vmatprep.subr.bf16.mxu0 0
      %1535 = vmatpush1.bf16.msra.mxu0 0
      %1536 = vmatprep.subr.bf16.mxu0 0
      %1537 = vmatpush1.bf16.msra.mxu0 0
      %1538 = vmatprep.subr.bf16.mxu0 0
      %1539 = vmatpush1.bf16.msra.mxu0 0
      %1540 = vmatprep.subr.bf16.mxu0 0
      %1541 = vmatpush1.bf16.msra.mxu0 0
      %1542 = vmatprep.subr.bf16.mxu0 0
      %1543 = vmatpush1.bf16.msra.mxu0 0
      %1544 = vmatprep.mubr.bf16.mxu0 0
      %1545 = vmatmul.mubr.bf16.gmra.mrb[0].mxu0 %v1510
      %v1546 = vpop.f32.mrb[0].mxu0
      %v1547 = vadd.f32 %v1495, %v1546
      %v1548 = vpop.f32.mrb[0].mxu0
      %v1549 = vpop.f32.mrb[0].mxu0
      %v1550 = vadd.f32 %v1495, %v1549
      %v1551 = vpop.f32.mrb[0].mxu0
      %1552 = vdwg.mxu0
      %v1553 = vadd.f32 %v1547, %v900
      %v1554 = vadd.f32 %v1550, %v901
      %v1555 = vld [vmem:[%s817] sm:$0x1]
      %v1556 = vld [vmem:[%s820] sm:$0x1]
      %v1557 = vsel %vm926, %v1553, 0.0
      %1558 = vadd.xlane.f32.xlu0 %v1557
      %v1559 = vpop.xlane.xlu0 %1558
      %v1560 = vsel %vm926, %v1554, 0.0
      %1561 = vadd.xlane.f32.xlu0 %v1560
      %v1562 = vpop.xlane.xlu0 %1561
      %v1563 = vrcp.pop 32.0
      %v1564 = vmul.f32 %v1559, %v1563
      %v1565 = vmul.f32 %v1562, %v1563
      %v1566 = vsub.f32 %v1553, %v1564
      %v1567 = vsub.f32 %v1554, %v1565
      %v1568 = vmul.f32 %v1566, %v1566
      %v1569 = vmul.f32 %v1567, %v1567
      %v1570 = vsel %vm926, %v1568, 0.0
      %1571 = vadd.xlane.f32.xlu0 %v1570
      %v1572 = vpop.xlane.xlu0 %1571
      %v1573 = vsel %vm926, %v1569, 0.0
      %1574 = vadd.xlane.f32.xlu0 %v1573
      %v1575 = vpop.xlane.xlu0 %1574
      %v1576 = vmul.f32 %v1572, %v1563
      %v1577 = vmul.f32 %v1575, %v1563
      %v1578 = vadd.f32 %v1576, 1e-12
      %v1579 = vadd.f32 %v1577, 1e-12
      %v1580 = vrsqrt.pop %v1578
      %v1581 = vrsqrt.pop %v1579
      %v1582 = vmul.f32 %v1566, %v1580
      %v1583 = vmul.f32 %v1567, %v1581
      %v1585 = vlaneseq
      %v1586 = vshrl.u32 %v1585, 7
      %v1587 = vsub.s32 0, %v1586
      %v1588 = vrot.slane %v1555, %v1587
      %v1590 = vmul.f32 %v1582, %v1588
      %v1591 = vmul.f32 %v1583, %v1588
      %v1593 = vlaneseq
      %v1594 = vshrl.u32 %v1593, 7
      %v1595 = vsub.s32 0, %v1594
      %v1596 = vrot.slane %v1556, %v1595
      %v1598 = vadd.f32 %v1590, %v1596
      %v1599 = vadd.f32 %v1591, %v1596
      %v1600 = vpack.c.bf16 %v1599, %v1598
      %v1601 = vld [vmem:[%s825] sm:$0xf]
      %v1602 = vld [vmem:[%s825 + $0x4] sm:$0xf]
      %v1603 = vld [vmem:[%s825 + $0x8] sm:$0xf]
      %v1604 = vld [vmem:[%s825 + $0xc] sm:$0xf]
      %v1605 = vld [vmem:[%s828] sm:$0x1]
      %v1607 = vlaneseq
      %v1608 = vshrl.u32 %v1607, 7
      %v1609 = vsub.s32 0, %v1608
      %v1610 = vrot.slane %v1605, %v1609
      %v1616 = vunpack.c.l.b16 %v1601
      %v1617 = vunpack.c.l.b16 %v1602
      %v1618 = vunpack.c.l.b16 %v1603
      %v1619 = vunpack.c.l.b16 %v1604
      %v1620 = vpack.c.b16 %v1617, %v1616
      %v1621 = vpack.c.b16 %v1619, %v1618
      %v1625 = vsel %vm926, %v1600, 0
      %1627 = vmatprep.subr.bf16.mxu0 0
      %1628 = vmatpush1.bf16.msra.mxu0 %v1620
      %1629 = vmatprep.subr.bf16.mxu0 0
      %1630 = vmatpush1.bf16.msra.mxu0 %v1621
      %1631 = vmatprep.subr.bf16.mxu0 0
      %1632 = vmatpush1.bf16.msra.mxu0 0
      %1633 = vmatprep.subr.bf16.mxu0 0
      %1634 = vmatpush1.bf16.msra.mxu0 0
      %1635 = vmatprep.subr.bf16.mxu0 0
      %1636 = vmatpush1.bf16.msra.mxu0 0
      %1637 = vmatprep.subr.bf16.mxu0 0
      %1638 = vmatpush1.bf16.msra.mxu0 0
      %1639 = vmatprep.subr.bf16.mxu0 0
      %1640 = vmatpush1.bf16.msra.mxu0 0
      %1641 = vmatprep.subr.bf16.mxu0 0
      %1642 = vmatpush1.bf16.msra.mxu0 0
      %1643 = vmatprep.subr.bf16.mxu0 0
      %1644 = vmatpush1.bf16.msra.mxu0 0
      %1645 = vmatprep.subr.bf16.mxu0 0
      %1646 = vmatpush1.bf16.msra.mxu0 0
      %1647 = vmatprep.subr.bf16.mxu0 0
      %1648 = vmatpush1.bf16.msra.mxu0 0
      %1649 = vmatprep.subr.bf16.mxu0 0
      %1650 = vmatpush1.bf16.msra.mxu0 0
      %1651 = vmatprep.subr.bf16.mxu0 0
      %1652 = vmatpush1.bf16.msra.mxu0 0
      %1653 = vmatprep.subr.bf16.mxu0 0
      %1654 = vmatpush1.bf16.msra.mxu0 0
      %1655 = vmatprep.subr.bf16.mxu0 0
      %1656 = vmatpush1.bf16.msra.mxu0 0
      %1657 = vmatprep.subr.bf16.mxu0 0
      %1658 = vmatpush1.bf16.msra.mxu0 0
      %1659 = vmatprep.mubr.bf16.mxu0 0
      %1660 = vmatmul.mubr.bf16.gmra.mrb[0].mxu0 %v1625
      %v1661 = vpop.f32.mrb[0].mxu0
      %v1662 = vadd.f32 %v1610, %v1661
      %v1663 = vpop.f32.mrb[0].mxu0
      %v1664 = vpop.f32.mrb[0].mxu0
      %v1665 = vadd.f32 %v1610, %v1664
      %v1666 = vpop.f32.mrb[0].mxu0
      %1667 = vdwg.mxu0
      %v1668 = vmul.f32 %v1662, 0.5
      %v1669 = vmul.f32 %v1665, 0.5
      %v1670 = vmul.f32 %v1662, 0.70710677
      %v1671 = vmul.f32 %v1665, 0.70710677
      %v1672 = verf.f32.pop %v1670
      %v1673 = verf.f32.pop %v1671
      %v1674 = vadd.f32 %v1672, 1.0
      %v1675 = vadd.f32 %v1673, 1.0
      %v1676 = vmul.f32 %v1668, %v1674
      %v1677 = vmul.f32 %v1669, %v1675
      %v1678 = vpack.c.bf16 %v1677, %v1676
      %v1679 = vld [vmem:[%s833] sm:$0xf]
      %v1680 = vld [vmem:[%s833 + $0x4] sm:$0xf]
      %v1681 = vld [vmem:[%s833 + $0x8] sm:$0xf]
      %v1682 = vld [vmem:[%s833 + $0xc] sm:$0xf]
      %v1683 = vld [vmem:[%s833 + $0x10] sm:$0xf]
      %v1684 = vld [vmem:[%s833 + $0x14] sm:$0xf]
      %v1685 = vld [vmem:[%s833 + $0x18] sm:$0xf]
      %v1686 = vld [vmem:[%s833 + $0x1c] sm:$0xf]
      %v1687 = vld [vmem:[%s836] sm:$0x1]
      %v1689 = vlaneseq
      %v1690 = vshrl.u32 %v1689, 7
      %v1691 = vsub.s32 0, %v1690
      %v1692 = vrot.slane %v1687, %v1691
      %v1702 = vunpack.c.l.b16 %v1679
      %v1703 = vunpack.c.l.b16 %v1680
      %v1704 = vunpack.c.l.b16 %v1681
      %v1705 = vunpack.c.l.b16 %v1682
      %v1706 = vunpack.c.l.b16 %v1683
      %v1707 = vunpack.c.l.b16 %v1684
      %v1708 = vunpack.c.l.b16 %v1685
      %v1709 = vunpack.c.l.b16 %v1686
      %v1710 = vpack.c.b16 %v1703, %v1702
      %v1711 = vpack.c.b16 %v1705, %v1704
      %v1712 = vpack.c.b16 %v1707, %v1706
      %v1713 = vpack.c.b16 %v1709, %v1708
      %vm1718 = vcmask 523264
      %v1720 = vsel %vm1718, %v1678, 0
      %1722 = vmatprep.subr.bf16.mxu0 0
      %1723 = vmatpush1.bf16.msra.mxu0 %v1710
      %1724 = vmatprep.subr.bf16.mxu0 0
      %1725 = vmatpush1.bf16.msra.mxu0 %v1711
      %1726 = vmatprep.subr.bf16.mxu0 0
      %1727 = vmatpush1.bf16.msra.mxu0 %v1712
      %1728 = vmatprep.subr.bf16.mxu0 0
      %1729 = vmatpush1.bf16.msra.mxu0 %v1713
      %1730 = vmatprep.subr.bf16.mxu0 0
      %1731 = vmatpush1.bf16.msra.mxu0 0
      %1732 = vmatprep.subr.bf16.mxu0 0
      %1733 = vmatpush1.bf16.msra.mxu0 0
      %1734 = vmatprep.subr.bf16.mxu0 0
      %1735 = vmatpush1.bf16.msra.mxu0 0
      %1736 = vmatprep.subr.bf16.mxu0 0
      %1737 = vmatpush1.bf16.msra.mxu0 0
      %1738 = vmatprep.subr.bf16.mxu0 0
      %1739 = vmatpush1.bf16.msra.mxu0 0
      %1740 = vmatprep.subr.bf16.mxu0 0
      %1741 = vmatpush1.bf16.msra.mxu0 0
      %1742 = vmatprep.subr.bf16.mxu0 0
      %1743 = vmatpush1.bf16.msra.mxu0 0
      %1744 = vmatprep.subr.bf16.mxu0 0
      %1745 = vmatpush1.bf16.msra.mxu0 0
      %1746 = vmatprep.subr.bf16.mxu0 0
      %1747 = vmatpush1.bf16.msra.mxu0 0
      %1748 = vmatprep.subr.bf16.mxu0 0
      %1749 = vmatpush1.bf16.msra.mxu0 0
      %1750 = vmatprep.subr.bf16.mxu0 0
      %1751 = vmatpush1.bf16.msra.mxu0 0
      %1752 = vmatprep.subr.bf16.mxu0 0
      %1753 = vmatpush1.bf16.msra.mxu0 0
      %1754 = vmatprep.mubr.bf16.mxu0 0
      %1755 = vmatmul.mubr.bf16.gmra.mrb[0].mxu0 %v1720
      %v1756 = vpop.f32.mrb[0].mxu0
      %v1757 = vadd.f32 %v1692, %v1756
      %v1758 = vpop.f32.mrb[0].mxu0
      %v1759 = vpop.f32.mrb[0].mxu0
      %v1760 = vadd.f32 %v1692, %v1759
      %v1761 = vpop.f32.mrb[0].mxu0
      %1762 = vdwg.mxu0
      %v1763 = vadd.f32 %v1757, %v1598
      %v1764 = vadd.f32 %v1760, %v1599
      %v1765 = vld [vmem:[%s839] sm:$0x1]
      %v1766 = vld [vmem:[%s842] sm:$0x1]
      %v1767 = vsel %vm926, %v1763, 0.0
      %1768 = vadd.xlane.f32.xlu0 %v1767
      %v1769 = vpop.xlane.xlu0 %1768
      %v1770 = vsel %vm926, %v1764, 0.0
      %1771 = vadd.xlane.f32.xlu0 %v1770
      %v1772 = vpop.xlane.xlu0 %1771
      %v1773 = vmul.f32 %v1769, %v1563
      %v1774 = vmul.f32 %v1772, %v1563
      %v1775 = vsub.f32 %v1763, %v1773
      %v1776 = vsub.f32 %v1764, %v1774
      %v1777 = vmul.f32 %v1775, %v1775
      %v1778 = vmul.f32 %v1776, %v1776
      %v1779 = vsel %vm926, %v1777, 0.0
      %1780 = vadd.xlane.f32.xlu0 %v1779
      %v1781 = vpop.xlane.xlu0 %1780
      %v1782 = vsel %vm926, %v1778, 0.0
      %1783 = vadd.xlane.f32.xlu0 %v1782
      %v1784 = vpop.xlane.xlu0 %1783
      %v1785 = vmul.f32 %v1781, %v1563
      %v1786 = vmul.f32 %v1784, %v1563
      %v1787 = vadd.f32 %v1785, 1e-12
      %v1788 = vadd.f32 %v1786, 1e-12
      %v1789 = vrsqrt.pop %v1787
      %v1790 = vrsqrt.pop %v1788
      %v1791 = vmul.f32 %v1775, %v1789
      %v1792 = vmul.f32 %v1776, %v1790
      %v1794 = vlaneseq
      %v1795 = vshrl.u32 %v1794, 7
      %v1796 = vsub.s32 0, %v1795
      %v1797 = vrot.slane %v1765, %v1796
      %v1799 = vmul.f32 %v1791, %v1797
      %v1800 = vmul.f32 %v1792, %v1797
      %v1802 = vlaneseq
      %v1803 = vshrl.u32 %v1802, 7
      %v1804 = vsub.s32 0, %v1803
      %v1805 = vrot.slane %v1766, %v1804
      %v1807 = vadd.f32 %v1799, %v1805
      %v1808 = vadd.f32 %v1800, %v1805
      %1809 = vst.msk [vmem:[#allocation2] sm:$0xff] %vm926, %v1807
      %1810 = vst.msk [vmem:[#allocation2 + $0x8] sm:$0xff] %vm926, %v1808
      %p1811 = scmp.eq.s32.totalorder %s35, 1
      // Predicated region
      $region113: #{_lambda_.1} parent=107 // pred_check
        %p1812 = pneg %p1811
      $region114: #{_lambda_.1} parent=107 // pred_check_branch
        %1814 = sbr.rel (%p1812) target = $region116
      $region115: #{_lambda_.1} parent=107 // pred_region
        %v1815 = vpack.c.bf16 %v1807, %v1807
        %v1816 = vpack.c.bf16 %v1808, %v1808
        %v1817 = vld [vmem:[%s16] sm:$0xf]
        %v1818 = vld [vmem:[%s16 + $0x4] sm:$0xf]
        %v1819 = vld [vmem:[%s16 + $0x8] sm:$0xf]
        %v1820 = vld [vmem:[%s16 + $0xc] sm:$0xf]
        %v1821 = vld [vmem:[%s17] sm:$0x1]
        %v1823 = vlaneseq
        %v1824 = vshrl.u32 %v1823, 7
        %v1825 = vsub.s32 0, %v1824
        %v1826 = vrot.slane %v1821, %v1825
        %v1830 = vunpack.c.l.b16 %v1815
        %v1831 = vunpack.c.l.b16 %v1816
        %v1832 = vrot.slane %v1831, 7
        %vm1833 = vcmask 1041409
        %v1834 = vsel %vm1833, %v1832, %v1830
        %v1835 = vpack.c.b16 %v1834, %v1834
        %v1840 = vunpack.c.l.b16 %v1817
        %v1841 = vunpack.c.l.b16 %v1818
        %v1842 = vunpack.c.l.b16 %v1819
        %v1843 = vunpack.c.l.b16 %v1820
        %v1844 = vpack.c.b16 %v1841, %v1840
        %v1845 = vpack.c.b16 %v1843, %v1842
        %v1849 = vsel %vm926, %v1835, 0
        %1851 = vmatprep.subr.bf16.mxu0 0
        %1852 = vmatpush1.bf16.msra.mxu0 %v1844
        %1853 = vmatprep.subr.bf16.mxu0 0
        %1854 = vmatpush1.bf16.msra.mxu0 %v1845
        %1855 = vmatprep.subr.bf16.mxu0 0
        %1856 = vmatpush1.bf16.msra.mxu0 0
        %1857 = vmatprep.subr.bf16.mxu0 0
        %1858 = vmatpush1.bf16.msra.mxu0 0
        %1859 = vmatprep.subr.bf16.mxu0 0
        %1860 = vmatpush1.bf16.msra.mxu0 0
        %1861 = vmatprep.subr.bf16.mxu0 0
        %1862 = vmatpush1.bf16.msra.mxu0 0
        %1863 = vmatprep.subr.bf16.mxu0 0
        %1864 = vmatpush1.bf16.msra.mxu0 0
        %1865 = vmatprep.subr.bf16.mxu0 0
        %1866 = vmatpush1.bf16.msra.mxu0 0
        %1867 = vmatprep.subr.bf16.mxu0 0
        %1868 = vmatpush1.bf16.msra.mxu0 0
        %1869 = vmatprep.subr.bf16.mxu0 0
        %1870 = vmatpush1.bf16.msra.mxu0 0
        %1871 = vmatprep.subr.bf16.mxu0 0
        %1872 = vmatpush1.bf16.msra.mxu0 0
        %1873 = vmatprep.subr.bf16.mxu0 0
        %1874 = vmatpush1.bf16.msra.mxu0 0
        %1875 = vmatprep.subr.bf16.mxu0 0
        %1876 = vmatpush1.bf16.msra.mxu0 0
        %1877 = vmatprep.subr.bf16.mxu0 0
        %1878 = vmatpush1.bf16.msra.mxu0 0
        %1879 = vmatprep.subr.bf16.mxu0 0
        %1880 = vmatpush1.bf16.msra.mxu0 0
        %1881 = vmatprep.subr.bf16.mxu0 0
        %1882 = vmatpush1.bf16.msra.mxu0 0
        %1883 = vmatprep.mubr.bf16.mxu0 0
        %1884 = vmatmul.mubr.bf16.gmra.mrb[0].mxu0 %v1849
        %v1885 = vpop.f32.mrb[0].mxu0
        %v1886 = vadd.f32 %v1826, %v1885
        %v1887 = vpop.f32.mrb[0].mxu0
        %v1888 = vpop.f32.mrb[0].mxu0
        %v1889 = vpop.f32.mrb[0].mxu0
        %1890 = vdwg.mxu0
        %v1891 = vmax.f32 %v1886, 0.0
        %v1892 = vpack.c.bf16 %v1891, %v1891
        %v1893 = vld [vmem:[%s18] sm:$0xf]
        %v1894 = vld [vmem:[%s18 + $0x4] sm:$0xf]
        %v1895 = vld [vmem:[%s19] sm:$0x1]
        %v1897 = vlaneseq
        %v1898 = vshrl.u32 %v1897, 7
        %v1899 = vsub.s32 0, %v1898
        %v1900 = vrot.slane %v1895, %v1899
        %v1904 = vunpack.c.l.b16 %v1893
        %v1905 = vunpack.c.l.b16 %v1894
        %v1906 = vpack.c.b16 %v1905, %v1904
        %v1909 = vsel %vm1039, %v1892, 0
        %1911 = vmatprep.subr.bf16.mxu0 0
        %1912 = vmatpush1.bf16.msra.mxu0 %v1906
        %1913 = vmatprep.subr.bf16.mxu0 0
        %1914 = vmatpush1.bf16.msra.mxu0 0
        %1915 = vmatprep.subr.bf16.mxu0 0
        %1916 = vmatpush1.bf16.msra.mxu0 0
        %1917 = vmatprep.subr.bf16.mxu0 0
        %1918 = vmatpush1.bf16.msra.mxu0 0
        %1919 = vmatprep.subr.bf16.mxu0 0
        %1920 = vmatpush1.bf16.msra.mxu0 0
        %1921 = vmatprep.subr.bf16.mxu0 0
        %1922 = vmatpush1.bf16.msra.mxu0 0
        %1923 = vmatprep.subr.bf16.mxu0 0
        %1924 = vmatpush1.bf16.msra.mxu0 0
        %1925 = vmatprep.subr.bf16.mxu0 0
        %1926 = vmatpush1.bf16.msra.mxu0 0
        %1927 = vmatprep.subr.bf16.mxu0 0
        %1928 = vmatpush1.bf16.msra.mxu0 0
        %1929 = vmatprep.subr.bf16.mxu0 0
        %1930 = vmatpush1.bf16.msra.mxu0 0
        %1931 = vmatprep.subr.bf16.mxu0 0
        %1932 = vmatpush1.bf16.msra.mxu0 0
        %1933 = vmatprep.subr.bf16.mxu0 0
        %1934 = vmatpush1.bf16.msra.mxu0 0
        %1935 = vmatprep.subr.bf16.mxu0 0
        %1936 = vmatpush1.bf16.msra.mxu0 0
        %1937 = vmatprep.subr.bf16.mxu0 0
        %1938 = vmatpush1.bf16.msra.mxu0 0
        %1939 = vmatprep.subr.bf16.mxu0 0
        %1940 = vmatpush1.bf16.msra.mxu0 0
        %1941 = vmatprep.subr.bf16.mxu0 0
        %1942 = vmatpush1.bf16.msra.mxu0 0
        %1943 = vmatprep.mubr.bf16.mxu0 0
        %1944 = vmatmul.mubr.bf16.gmra.mrb[0].mxu0 %v1909
        %v1945 = vpop.f32.mrb[0].mxu0
        %v1946 = vadd.f32 %v1900, %v1945
        %v1947 = vpop.f32.mrb[0].mxu0
        %v1948 = vpop.f32.mrb[0].mxu0
        %v1949 = vpop.f32.mrb[0].mxu0
        %1950 = vdwg.mxu0
        %v1951 = vmax.f32 %v1946, 0.0
        %v1952 = vpack.c.bf16 %v1951, %v1951
        %v1953 = vld [vmem:[%s20] sm:$0xf]
        %v1954 = vld [vmem:[%s20 + $0x4] sm:$0xf]
        %v1955 = vld [vmem:[#allocation3] sm:$0x1]
        %v1957 = vlaneseq
        %v1958 = vshrl.u32 %v1957, 7
        %v1959 = vsub.s32 0, %v1958
        %v1960 = vrot.slane %v1955, %v1959
        %v1964 = vunpack.c.l.b16 %v1953
        %v1965 = vunpack.c.l.b16 %v1954
        %v1966 = vpack.c.b16 %v1965, %v1964
        %v1969 = vsel %vm1039, %v1952, 0
        %1971 = vmatprep.subr.bf16.mxu0 0
        %1972 = vmatpush1.bf16.msra.mxu0 %v1966
        %1973 = vmatprep.subr.bf16.mxu0 0
        %1974 = vmatpush1.bf16.msra.mxu0 0
        %1975 = vmatprep.subr.bf16.mxu0 0
        %1976 = vmatpush1.bf16.msra.mxu0 0
        %1977 = vmatprep.subr.bf16.mxu0 0
        %1978 = vmatpush1.bf16.msra.mxu0 0
        %1979 = vmatprep.subr.bf16.mxu0 0
        %1980 = vmatpush1.bf16.msra.mxu0 0
        %1981 = vmatprep.subr.bf16.mxu0 0
        %1982 = vmatpush1.bf16.msra.mxu0 0
        %1983 = vmatprep.subr.bf16.mxu0 0
        %1984 = vmatpush1.bf16.msra.mxu0 0
        %1985 = vmatprep.subr.bf16.mxu0 0
        %1986 = vmatpush1.bf16.msra.mxu0 0
        %1987 = vmatprep.subr.bf16.mxu0 0
        %1988 = vmatpush1.bf16.msra.mxu0 0
        %1989 = vmatprep.subr.bf16.mxu0 0
        %1990 = vmatpush1.bf16.msra.mxu0 0
        %1991 = vmatprep.subr.bf16.mxu0 0
        %1992 = vmatpush1.bf16.msra.mxu0 0
        %1993 = vmatprep.subr.bf16.mxu0 0
        %1994 = vmatpush1.bf16.msra.mxu0 0
        %1995 = vmatprep.subr.bf16.mxu0 0
        %1996 = vmatpush1.bf16.msra.mxu0 0
        %1997 = vmatprep.subr.bf16.mxu0 0
        %1998 = vmatpush1.bf16.msra.mxu0 0
        %1999 = vmatprep.subr.bf16.mxu0 0
        %2000 = vmatpush1.bf16.msra.mxu0 0
        %2001 = vmatprep.subr.bf16.mxu0 0
        %2002 = vmatpush1.bf16.msra.mxu0 0
        %2003 = vmatprep.mubr.bf16.mxu0 0
        %2004 = vmatmul.mubr.bf16.gmra.mrb[0].mxu0 %v1969
        %v2005 = vpop.f32.mrb[0].mxu0
        %v2006 = vadd.f32 %v1960, %v2005
        %v2007 = vpop.f32.mrb[0].mxu0
        %v2008 = vpop.f32.mrb[0].mxu0
        %v2009 = vpop.f32.mrb[0].mxu0
        %2010 = vdwg.mxu0
        %vm2011 = vcmask 1024
        %2012 = vst.msk [vmem:[%s22] sm:$0x3] %vm2011, %v2006
      $region116: #{_lambda_.1} parent=107 // pred_fallthru
        _
      // Predicated region
      $region117: #{_lambda_.1} parent=107 // pred_check
        %p2013 = pneg %p570
      $region118: #{_lambda_.1} parent=107 // pred_check_branch
        %2015 = sbr.rel (%p2013) target = $region120
      $region119: #{_lambda_.1} parent=107 // pred_region
        _
      $region120: #{_lambda_.1} parent=107 // pred_fallthru
        _
      // Predicated region
      $region121: #{_lambda_.1} parent=107 // pred_check
        %p2016 = pneg %p570
      $region122: #{_lambda_.1} parent=107 // pred_check_branch
        %2018 = sbr.rel (%p2016) target = $region124
      $region123: #{_lambda_.1} parent=107 // pred_region
        _
      $region124: #{_lambda_.1} parent=107 // pred_fallthru
        _
    $region108: #{_lambda_.1} parent=5 // pred_fallthru
      _
    %p2019 = scmp.le.s32.totalorder 2, %s30
    // Predicated region
    $region125: #{_lambda_.1} parent=5 // pred_check
      %p2020 = pneg %p2019
    $region126: #{_lambda_.1} parent=5 // pred_check_branch
      %2022 = sbr.rel (%p2020) target = $region128
    $region127: #{_lambda_.1} parent=5 // pred_region
      %s2023 = ssub.s32 %s30, 2
    $region128: #{_lambda_.1} parent=5 // pred_fallthru
      _
  $region6: #{_lambda_.1} parent=0 // loop_footer
    %s34 = sadd.s32 1, %s30
  $region7: #{_lambda_.1} parent=0 // loop_footer_branch
    %29 = sbr.rel target = $region3
  $region8: #{_lambda_.1} parent=0 // loop_exit
    _

</llo_original>
